<compile_context>
chip_gen: v6e
topology: v6e:2x2x1
jax: 0.10.0
libtpu: 0.0.40
codegen_flags: <defaults>
</compile_context>

<pallas_src>
import functools

import jax
import jax.numpy as jnp
from jax.experimental import pallas as pl
from jax.experimental.pallas import tpu as pltpu

# ------------------------- model config (small, synthetic) -------------------------
HIDDEN = 32
NUM_HEADS = 4
HEAD_DIM = HIDDEN // NUM_HEADS
INTERMEDIATE = 64
NUM_LAYERS = 2
VOCAB = 100
MAX_POS = 16
TYPE_VOCAB = 2
EPS = 1e-12


# ------------------------------- fused Pallas kernel --------------------------------
def _layernorm(x, gamma, beta):
    # var = E[x^2] - mu^2: the two cross-lane reductions are independent, halving the
    # dependent XLU chain vs mean -> subtract -> square -> mean.
    mu = jnp.mean(x, axis=-1, keepdims=True)
    msq = jnp.mean(x * x, axis=-1, keepdims=True)
    var = msq - mu * mu
    return (x - mu) * jax.lax.rsqrt(var + EPS) * gamma + beta


def _encoder_kernel(emb_ref, mask_ref, eg_ref, eb_ref,
                    wqkv_ref, bqkv_ref, wo_ref, bo_ref, ln1g_ref, ln1b_ref,
                    wi_ref, bi_ref, wout_ref, bout_ref, ln2g_ref, ln2b_ref,
                    out_ref, h_ref, *, B, S):
    layer = pl.program_id(0)

    # Embedding LayerNorm once, at the first grid step (embedding sum done in wrapper).
    @pl.when(layer == 0)
    def _():
        h_ref[...] = _layernorm(emb_ref[...], eg_ref[...], eb_ref[...])

    h = h_ref[...]                                            # (B*S, H), f32

    # ---------------- multi-head self-attention ----------------
    # One fused lane-dense QKV projection: (B*S, H) @ (H, 3H) in bf16, f32 accumulate.
    # 1/sqrt(head_dim) is pre-folded into the Q columns of wqkv/bqkv.
    qkv = jnp.dot(h.astype(jnp.bfloat16), wqkv_ref[...],
                  preferred_element_type=jnp.float32) + bqkv_ref[...]

    # Additive mask broadcast hoisted out of the head loop: one broadcast per layer.
    mask_full = jnp.broadcast_to(mask_ref[...], (B, S, S))

    # Per-head score/context einsums (single batch dim = B each, Mosaic-friendly);
    # heads stay a static loop but all projections above/below are single H-wide matmuls.
    ctx_heads = []
    for hd in range(NUM_HEADS):
        q_h = qkv[:, hd * HEAD_DIM:(hd + 1) * HEAD_DIM]
        k_h = qkv[:, HIDDEN + hd * HEAD_DIM:HIDDEN + (hd + 1) * HEAD_DIM]
        v_h = qkv[:, 2 * HIDDEN + hd * HEAD_DIM:2 * HIDDEN + (hd + 1) * HEAD_DIM]
        q_h = q_h.reshape(B, S, HEAD_DIM).astype(jnp.bfloat16)
        k_h = k_h.reshape(B, S, HEAD_DIM).astype(jnp.bfloat16)
        v_h = v_h.reshape(B, S, HEAD_DIM).astype(jnp.bfloat16)
        s = jnp.einsum('bqd,bkd->bqk', q_h, k_h,
                       preferred_element_type=jnp.float32) + mask_full
        s = s - jnp.max(s, axis=-1, keepdims=True)
        p = jnp.exp(s)
        p = p * pl.reciprocal(jnp.sum(p, axis=-1, keepdims=True), approx=True)
        ctx_heads.append(jnp.einsum('bqk,bkd->bqd', p.astype(jnp.bfloat16), v_h,
                                    preferred_element_type=jnp.float32))

    # Merge heads once; single K=H output projection (no per-head f32 accumulator).
    ctx = jnp.concatenate(ctx_heads, axis=-1).reshape(B * S, HIDDEN)
    attn = jnp.dot(ctx.astype(jnp.bfloat16), wo_ref[...],
                   preferred_element_type=jnp.float32) + bo_ref[...]
    h = _layernorm(attn + h, ln1g_ref[...], ln1b_ref[...])

    # ---------------- feed-forward ----------------
    ffn = jnp.dot(h.astype(jnp.bfloat16), wi_ref[...],
                  preferred_element_type=jnp.float32) + bi_ref[...]
    # TODO(synk): HF BERT uses exact (erf) GELU; tanh approximation used here.
    ffn = jax.nn.gelu(ffn, approximate=True)
    ffn = jnp.dot(ffn.astype(jnp.bfloat16), wout_ref[...],
                  preferred_element_type=jnp.float32) + bout_ref[...]
    h = _layernorm(ffn + h, ln2g_ref[...], ln2b_ref[...])

    h_ref[...] = h                                            # carry to next layer step

    @pl.when(layer == pl.num_programs(0) - 1)
    def _():
        # AdaptiveAvgPool1d(1) over the sequence axis == mean over seq (fused finalize).
        out_ref[...] = jnp.mean(h.reshape(B, S, HIDDEN), axis=1)


def encoder_fused(emb2d, add_mask, params, B, S):
    def full_spec(arr):
        zeros = (0,) * arr.ndim
        return pl.BlockSpec(arr.shape, lambda l, _z=zeros: _z)

    def layer_spec(arr):
        # Leading L axis indexed by the grid step: each layer's weight block is streamed
        # (and double-buffered) by the Pallas pipeline instead of all layers resident.
        zeros = (0,) * (arr.ndim - 1)
        return pl.BlockSpec((None,) + arr.shape[1:], lambda l, _z=zeros: (l,) + _z)

    global_args = [emb2d, add_mask, params["emb_ln_g"], params["emb_ln_b"]]
    layer_args = [params[k] for k in ("wqkv", "bqkv", "wo", "bo", "ln1_g", "ln1_b",
                                      "wi", "bi", "wout", "bout", "ln2_g", "ln2_b")]

    return pl.pallas_call(
        functools.partial(_encoder_kernel, B=B, S=S),
        grid=(NUM_LAYERS,),
        in_specs=[full_spec(a) for a in global_args] + [layer_spec(a) for a in layer_args],
        out_specs=pl.BlockSpec((B, HIDDEN), lambda l: (0, 0)),
        out_shape=jax.ShapeDtypeStruct((B, HIDDEN), jnp.float32),
        scratch_shapes=[pltpu.VMEM((B * S, HIDDEN), jnp.float32)],  # hidden state carry
        compiler_params=pltpu.CompilerParams(
            dimension_semantics=("arbitrary",),     # layers are sequentially dependent
            vmem_limit_bytes=32 * 1024 * 1024,
        ),
    )(*global_args, *layer_args)


# --------------------------- parameter init (deterministic) ------------------------
def init_params(key):
    keys = iter(jax.random.split(key, 16))

    def nrm(shape):
        return (0.02 * jax.random.normal(next(keys), shape)).astype(jnp.float32)

    L = NUM_LAYERS
    scale = 1.0 / (HEAD_DIM ** 0.5)
    # 1/sqrt(head_dim) folded into the Q weights/bias at parameter-build (load) time.
    wq = nrm((L, HIDDEN, HIDDEN)) * scale
    wk = nrm((L, HIDDEN, HIDDEN))
    wv = nrm((L, HIDDEN, HIDDEN))
    bq = jnp.zeros((L, 1, HIDDEN), jnp.float32)       # (already scaled; zero here)
    bk = jnp.zeros((L, 1, HIDDEN), jnp.float32)
    bv = jnp.zeros((L, 1, HIDDEN), jnp.float32)
    return {
        "tok_emb": nrm((VOCAB, HIDDEN)),
        "pos_emb": nrm((MAX_POS, HIDDEN)),
        "typ_emb": nrm((TYPE_VOCAB, HIDDEN)),
        "emb_ln_g": jnp.ones((1, HIDDEN), jnp.float32),
        "emb_ln_b": jnp.zeros((1, HIDDEN), jnp.float32),
        # Fused QKV weights, bf16 for MXU throughput + halved resident/streamed VMEM.
        "wqkv": jnp.concatenate([wq, wk, wv], axis=-1).astype(jnp.bfloat16),
        "bqkv": jnp.concatenate([bq, bk, bv], axis=-1),
        "wo": nrm((L, HIDDEN, HIDDEN)).astype(jnp.bfloat16),
        "bo": jnp.zeros((L, 1, HIDDEN), jnp.float32),
        "ln1_g": jnp.ones((L, 1, HIDDEN), jnp.float32),
        "ln1_b": jnp.zeros((L, 1, HIDDEN), jnp.float32),
        "wi": nrm((L, HIDDEN, INTERMEDIATE)).astype(jnp.bfloat16),
        "bi": jnp.zeros((L, 1, INTERMEDIATE), jnp.float32),
        "wout": nrm((L, INTERMEDIATE, HIDDEN)).astype(jnp.bfloat16),
        "bout": jnp.zeros((L, 1, HIDDEN), jnp.float32),
        "ln2_g": jnp.ones((L, 1, HIDDEN), jnp.float32),
        "ln2_b": jnp.zeros((L, 1, HIDDEN), jnp.float32),
    }


# ------------------------------- forward pass ---------------------------------------
@jax.jit
def sentence_transformer_forward(params, input_ids, attention_mask):
    B, S = input_ids.shape

    # Embedding lookups (gather) are glue in plain JAX; everything else is in the kernel.
    tok = params["tok_emb"][input_ids]                     # (B, S, H)
    pos = params["pos_emb"][:S][None, :, :]                # (1, S, H)
    typ = params["typ_emb"][0][None, None, :]              # (1, 1, H)
    emb = (tok + pos + typ).reshape(B * S, HIDDEN).astype(jnp.float32)

    # Additive attention mask: (B, 1, S), broadcast once per layer inside the kernel.
    add_mask = ((1.0 - attention_mask.astype(jnp.float32)) * -1e9).reshape(B, 1, S)

    # embeddings = AdaptiveAvgPool1d(1)(last_hidden.permute(0,2,1)).squeeze(2)
    return encoder_fused(emb, add_mask, params, B, S)      # (B, H)


if __name__ == "__main__":
    key = jax.random.PRNGKey(0)
    pkey, ikey = jax.random.split(key)
    params = init_params(pkey)

    B, S = 2, 8
    input_ids = jax.random.randint(ikey, (B, S), 0, VOCAB, dtype=jnp.int32)
    # second sentence padded (mask=0 on the last two positions), mimicking tokenizer padding
    attention_mask = jnp.array([[1, 1, 1, 1, 1, 1, 1, 1],
                                [1, 1, 1, 1, 1, 1, 0, 0]], dtype=jnp.int32)

    embeddings = sentence_transformer_forward(params, input_ids, attention_mask)
    jax.block_until_ready(embeddings)
    assert embeddings.shape == (B, HIDDEN) and embeddings.dtype == jnp.float32
    print("KERNEL_OK")
</pallas_src>

<mosaic_0001>
module attributes {stable_mosaic.version = 11 : i64} {
  func.func @_encoder_kernel(%arg0: i32, %arg1: memref<16x32xf32, #tpu.memory_space<vmem>>, %arg2: memref<2x1x8xf32, #tpu.memory_space<vmem>>, %arg3: memref<1x32xf32, #tpu.memory_space<vmem>>, %arg4: memref<1x32xf32, #tpu.memory_space<vmem>>, %arg5: memref<1x32x96xbf16, #tpu.memory_space<vmem>>, %arg6: memref<1x1x96xf32, #tpu.memory_space<vmem>>, %arg7: memref<1x32x32xbf16, #tpu.memory_space<vmem>>, %arg8: memref<1x1x32xf32, #tpu.memory_space<vmem>>, %arg9: memref<1x1x32xf32, #tpu.memory_space<vmem>>, %arg10: memref<1x1x32xf32, #tpu.memory_space<vmem>>, %arg11: memref<1x32x64xbf16, #tpu.memory_space<vmem>>, %arg12: memref<1x1x64xf32, #tpu.memory_space<vmem>>, %arg13: memref<1x64x32xbf16, #tpu.memory_space<vmem>>, %arg14: memref<1x1x32xf32, #tpu.memory_space<vmem>>, %arg15: memref<1x1x32xf32, #tpu.memory_space<vmem>>, %arg16: memref<1x1x32xf32, #tpu.memory_space<vmem>>, %arg17: memref<2x32xf32, #tpu.memory_space<vmem>>, %arg18: memref<16x32xf32, #tpu.memory_space<vmem>>) attributes {dimension_semantics = [#tpu.dimension_semantics<arbitrary>], iteration_bounds = array<i64: 2>, scalar_prefetch = 0 : i64, scratch_operands = 1 : i64, tpu.core_type = #tpu.core_type<tc>, window_params = [{pipeline_mode = #tpu.pipeline_mode<synchronous>, transform_indices = @transform_0, window_bounds = array<i64: 16, 32>}, {pipeline_mode = #tpu.pipeline_mode<synchronous>, transform_indices = @transform_1, window_bounds = array<i64: 2, 1, 8>}, {pipeline_mode = #tpu.pipeline_mode<synchronous>, transform_indices = @transform_2, window_bounds = array<i64: 1, 32>}, {pipeline_mode = #tpu.pipeline_mode<synchronous>, transform_indices = @transform_3, window_bounds = array<i64: 1, 32>}, {transform_indices = @transform_4, window_bounds = array<i64: 1, 32, 96>}, {transform_indices = @transform_5, window_bounds = array<i64: 1, 1, 96>}, {transform_indices = @transform_6, window_bounds = array<i64: 1, 32, 32>}, {transform_indices = @transform_7, window_bounds = array<i64: 1, 1, 32>}, {transform_indices = @transform_8, window_bounds = array<i64: 1, 1, 32>}, {transform_indices = @transform_9, window_bounds = array<i64: 1, 1, 32>}, {transform_indices = @transform_10, window_bounds = array<i64: 1, 32, 64>}, {transform_indices = @transform_11, window_bounds = array<i64: 1, 1, 64>}, {transform_indices = @transform_12, window_bounds = array<i64: 1, 64, 32>}, {transform_indices = @transform_13, window_bounds = array<i64: 1, 1, 32>}, {transform_indices = @transform_14, window_bounds = array<i64: 1, 1, 32>}, {transform_indices = @transform_15, window_bounds = array<i64: 1, 1, 32>}, {pipeline_mode = #tpu.pipeline_mode<synchronous>, transform_indices = @transform_16, window_bounds = array<i64: 2, 32>}]} {
    %c0_i32 = arith.constant 0 : i32
    %0 = arith.cmpi eq, %arg0, %c0_i32 : i32
    %1 = arith.extui %0 : i1 to i32
    %c0_i32_0 = arith.constant 0 : i32
    %2 = arith.cmpi ne, %1, %c0_i32_0 : i32
    scf.if %2 {
      %c0_77 = arith.constant 0 : index
      %c0_78 = arith.constant 0 : index
      %204 = vector.load %arg1[%c0_77, %c0_78] : memref<16x32xf32, #tpu.memory_space<vmem>>, vector<16x32xf32>
      %c0_79 = arith.constant 0 : index
      %c0_80 = arith.constant 0 : index
      %205 = vector.load %arg3[%c0_79, %c0_80] : memref<1x32xf32, #tpu.memory_space<vmem>>, vector<1x32xf32>
      %c0_81 = arith.constant 0 : index
      %c0_82 = arith.constant 0 : index
      %206 = vector.load %arg4[%c0_81, %c0_82] : memref<1x32xf32, #tpu.memory_space<vmem>>, vector<1x32xf32>
      %cst_83 = arith.constant dense<0.000000e+00> : vector<16xf32>
      %207 = vector.multi_reduction <add>, %204, %cst_83 [1] : vector<16x32xf32> to vector<16xf32>
      %208 = vector.shape_cast %207 : vector<16xf32> to vector<16x1xf32>
      %cst_84 = arith.constant 3.200000e+01 : f32
      %209 = vector.broadcast %cst_84 : f32 to vector<16x1xf32>
      %210 = arith.divf %208, %209 : vector<16x1xf32>
      %211 = arith.mulf %204, %204 : vector<16x32xf32>
      %cst_85 = arith.constant dense<0.000000e+00> : vector<16xf32>
      %212 = vector.multi_reduction <add>, %211, %cst_85 [1] : vector<16x32xf32> to vector<16xf32>
      %213 = vector.shape_cast %212 : vector<16xf32> to vector<16x1xf32>
      %cst_86 = arith.constant 3.200000e+01 : f32
      %214 = vector.broadcast %cst_86 : f32 to vector<16x1xf32>
      %215 = arith.divf %213, %214 : vector<16x1xf32>
      %216 = arith.mulf %210, %210 : vector<16x1xf32>
      %217 = arith.subf %215, %216 : vector<16x1xf32>
      %218 = vector.broadcast %210 : vector<16x1xf32> to vector<16x32xf32>
      %219 = arith.subf %204, %218 : vector<16x32xf32>
      %cst_87 = arith.constant 9.99999996E-13 : f32
      %220 = vector.broadcast %cst_87 : f32 to vector<16x1xf32>
      %221 = arith.addf %217, %220 : vector<16x1xf32>
      %222 = math.rsqrt %221 : vector<16x1xf32>
      %223 = vector.broadcast %222 : vector<16x1xf32> to vector<16x32xf32>
      %224 = arith.mulf %219, %223 : vector<16x32xf32>
      %225 = vector.broadcast %205 : vector<1x32xf32> to vector<16x32xf32>
      %226 = arith.mulf %224, %225 : vector<16x32xf32>
      %227 = vector.broadcast %206 : vector<1x32xf32> to vector<16x32xf32>
      %228 = arith.addf %226, %227 : vector<16x32xf32>
      %c0_88 = arith.constant 0 : index
      %c0_89 = arith.constant 0 : index
      %229 = vector.load %arg18[%c0_88, %c0_89] : memref<16x32xf32, #tpu.memory_space<vmem>>, vector<16x32xf32>
      tpu.vector_store %arg18[%c0_88, %c0_89], %228 {strides = array<i32>} : memref<16x32xf32, #tpu.memory_space<vmem>>, vector<16x32xf32>,
    } else {
    }
    %c0 = arith.constant 0 : index
    %c0_1 = arith.constant 0 : index
    %3 = vector.load %arg18[%c0, %c0_1] : memref<16x32xf32, #tpu.memory_space<vmem>>, vector<16x32xf32>
    %4 = arith.truncf %3 : vector<16x32xf32> to vector<16x32xbf16>
    %c0_2 = arith.constant 0 : index
    %c0_3 = arith.constant 0 : index
    %c0_4 = arith.constant 0 : index
    %5 = vector.load %arg5[%c0_2, %c0_3, %c0_4] : memref<1x32x96xbf16, #tpu.memory_space<vmem>>, vector<1x32x96xbf16>
    %6 = vector.shape_cast %5 : vector<1x32x96xbf16> to vector<32x96xbf16>
    %cst = arith.constant dense<0.000000e+00> : vector<16x96xf32>
    %7 = tpu.matmul %4, %6, %cst {dimension_numbers = #tpu.dot_dimension_numbers<[1], [0], [0], [1], [0, 0, 1, 1], [], []>} : vector<16x32xbf16>, vector<32x96xbf16>, vector<16x96xf32> -> vector<16x96xf32>
    %c0_5 = arith.constant 0 : index
    %c0_6 = arith.constant 0 : index
    %c0_7 = arith.constant 0 : index
    %8 = vector.load %arg6[%c0_5, %c0_6, %c0_7] : memref<1x1x96xf32, #tpu.memory_space<vmem>>, vector<1x1x96xf32>
    %9 = vector.shape_cast %8 : vector<1x1x96xf32> to vector<1x96xf32>
    %10 = vector.broadcast %9 : vector<1x96xf32> to vector<16x96xf32>
    %11 = arith.addf %7, %10 : vector<16x96xf32>
    %c0_8 = arith.constant 0 : index
    %c0_9 = arith.constant 0 : index
    %c0_10 = arith.constant 0 : index
    %12 = vector.load %arg2[%c0_8, %c0_9, %c0_10] : memref<2x1x8xf32, #tpu.memory_space<vmem>>, vector<2x1x8xf32>
    %13 = vector.shape_cast %12 : vector<2x1x8xf32> to vector<2x1x8xf32>
    %14 = vector.broadcast %13 : vector<2x1x8xf32> to vector<2x8x8xf32>
    %15 = vector.extract_strided_slice %11 {offsets = [0, 0], sizes = [16, 8], strides = [1, 1]} : vector<16x96xf32> to vector<16x8xf32>
    %16 = vector.extract_strided_slice %11 {offsets = [0, 32], sizes = [16, 8], strides = [1, 1]} : vector<16x96xf32> to vector<16x8xf32>
    %17 = vector.extract_strided_slice %11 {offsets = [0, 64], sizes = [16, 8], strides = [1, 1]} : vector<16x96xf32> to vector<16x8xf32>
    %18 = vector.shape_cast %15 : vector<16x8xf32> to vector<2x8x8xf32>
    %19 = arith.truncf %18 : vector<2x8x8xf32> to vector<2x8x8xbf16>
    %20 = vector.shape_cast %16 : vector<16x8xf32> to vector<2x8x8xf32>
    %21 = arith.truncf %20 : vector<2x8x8xf32> to vector<2x8x8xbf16>
    %22 = vector.shape_cast %17 : vector<16x8xf32> to vector<2x8x8xf32>
    %23 = arith.truncf %22 : vector<2x8x8xf32> to vector<2x8x8xbf16>
    "tpu.trace_start"() <{level = 10 : i32, message = "bqd,bkd->bqk"}> : () -> ()
    %cst_11 = arith.constant dense<0.000000e+00> : vector<2x8x8xf32>
    %24 = tpu.matmul %19, %21, %cst_11 {dimension_numbers = #tpu.dot_dimension_numbers<[2], [2], [1], [1], [0, 0, 0, 1, 1, 1], [0], [0]>} : vector<2x8x8xbf16>, vector<2x8x8xbf16>, vector<2x8x8xf32> -> vector<2x8x8xf32>
    "tpu.trace_stop"() : () -> ()
    %25 = arith.addf %24, %14 : vector<2x8x8xf32>
    %cst_12 = arith.constant dense<0xFF800000> : vector<2x8xf32>
    %26 = vector.multi_reduction <maximumf>, %25, %cst_12 [2] : vector<2x8x8xf32> to vector<2x8xf32>
    %27 = vector.shape_cast %26 : vector<2x8xf32> to vector<2x8x1xf32>
    %28 = vector.broadcast %27 : vector<2x8x1xf32> to vector<2x8x8xf32>
    %29 = arith.subf %25, %28 : vector<2x8x8xf32>
    %30 = math.exp %29 : vector<2x8x8xf32>
    %cst_13 = arith.constant dense<0.000000e+00> : vector<2x8xf32>
    %31 = vector.multi_reduction <add>, %30, %cst_13 [2] : vector<2x8x8xf32> to vector<2x8xf32>
    %32 = vector.shape_cast %31 : vector<2x8xf32> to vector<2x8x1xf32>
    %33 = tpu.reciprocal %32 {approx = true} : vector<2x8x1xf32> -> vector<2x8x1xf32>
    %34 = vector.broadcast %33 : vector<2x8x1xf32> to vector<2x8x8xf32>
    %35 = arith.mulf %30, %34 : vector<2x8x8xf32>
    %36 = arith.truncf %35 : vector<2x8x8xf32> to vector<2x8x8xbf16>
    "tpu.trace_start"() <{level = 10 : i32, message = "bqk,bkd->bqd"}> : () -> ()
    %cst_14 = arith.constant dense<0.000000e+00> : vector<2x8x8xf32>
    %37 = tpu.matmul %36, %23, %cst_14 {dimension_numbers = #tpu.dot_dimension_numbers<[2], [1], [1], [2], [0, 0, 0, 1, 1, 2], [0], [0]>} : vector<2x8x8xbf16>, vector<2x8x8xbf16>, vector<2x8x8xf32> -> vector<2x8x8xf32>
    "tpu.trace_stop"() : () -> ()
    %38 = vector.extract_strided_slice %11 {offsets = [0, 8], sizes = [16, 8], strides = [1, 1]} : vector<16x96xf32> to vector<16x8xf32>
    %39 = vector.extract_strided_slice %11 {offsets = [0, 40], sizes = [16, 8], strides = [1, 1]} : vector<16x96xf32> to vector<16x8xf32>
    %40 = vector.extract_strided_slice %11 {offsets = [0, 72], sizes = [16, 8], strides = [1, 1]} : vector<16x96xf32> to vector<16x8xf32>
    %41 = vector.shape_cast %38 : vector<16x8xf32> to vector<2x8x8xf32>
    %42 = arith.truncf %41 : vector<2x8x8xf32> to vector<2x8x8xbf16>
    %43 = vector.shape_cast %39 : vector<16x8xf32> to vector<2x8x8xf32>
    %44 = arith.truncf %43 : vector<2x8x8xf32> to vector<2x8x8xbf16>
    %45 = vector.shape_cast %40 : vector<16x8xf32> to vector<2x8x8xf32>
    %46 = arith.truncf %45 : vector<2x8x8xf32> to vector<2x8x8xbf16>
    "tpu.trace_start"() <{level = 10 : i32, message = "bqd,bkd->bqk"}> : () -> ()
    %cst_15 = arith.constant dense<0.000000e+00> : vector<2x8x8xf32>
    %47 = tpu.matmul %42, %44, %cst_15 {dimension_numbers = #tpu.dot_dimension_numbers<[2], [2], [1], [1], [0, 0, 0, 1, 1, 1], [0], [0]>} : vector<2x8x8xbf16>, vector<2x8x8xbf16>, vector<2x8x8xf32> -> vector<2x8x8xf32>
    "tpu.trace_stop"() : () -> ()
    %48 = arith.addf %47, %14 : vector<2x8x8xf32>
    %cst_16 = arith.constant dense<0xFF800000> : vector<2x8xf32>
    %49 = vector.multi_reduction <maximumf>, %48, %cst_16 [2] : vector<2x8x8xf32> to vector<2x8xf32>
    %50 = vector.shape_cast %49 : vector<2x8xf32> to vector<2x8x1xf32>
    %51 = vector.broadcast %50 : vector<2x8x1xf32> to vector<2x8x8xf32>
    %52 = arith.subf %48, %51 : vector<2x8x8xf32>
    %53 = math.exp %52 : vector<2x8x8xf32>
    %cst_17 = arith.constant dense<0.000000e+00> : vector<2x8xf32>
    %54 = vector.multi_reduction <add>, %53, %cst_17 [2] : vector<2x8x8xf32> to vector<2x8xf32>
    %55 = vector.shape_cast %54 : vector<2x8xf32> to vector<2x8x1xf32>
    %56 = tpu.reciprocal %55 {approx = true} : vector<2x8x1xf32> -> vector<2x8x1xf32>
    %57 = vector.broadcast %56 : vector<2x8x1xf32> to vector<2x8x8xf32>
    %58 = arith.mulf %53, %57 : vector<2x8x8xf32>
    %59 = arith.truncf %58 : vector<2x8x8xf32> to vector<2x8x8xbf16>
    "tpu.trace_start"() <{level = 10 : i32, message = "bqk,bkd->bqd"}> : () -> ()
    %cst_18 = arith.constant dense<0.000000e+00> : vector<2x8x8xf32>
    %60 = tpu.matmul %59, %46, %cst_18 {dimension_numbers = #tpu.dot_dimension_numbers<[2], [1], [1], [2], [0, 0, 0, 1, 1, 2], [0], [0]>} : vector<2x8x8xbf16>, vector<2x8x8xbf16>, vector<2x8x8xf32> -> vector<2x8x8xf32>
    "tpu.trace_stop"() : () -> ()
    %61 = vector.extract_strided_slice %11 {offsets = [0, 16], sizes = [16, 8], strides = [1, 1]} : vector<16x96xf32> to vector<16x8xf32>
    %62 = vector.extract_strided_slice %11 {offsets = [0, 48], sizes = [16, 8], strides = [1, 1]} : vector<16x96xf32> to vector<16x8xf32>
    %63 = vector.extract_strided_slice %11 {offsets = [0, 80], sizes = [16, 8], strides = [1, 1]} : vector<16x96xf32> to vector<16x8xf32>
    %64 = vector.shape_cast %61 : vector<16x8xf32> to vector<2x8x8xf32>
    %65 = arith.truncf %64 : vector<2x8x8xf32> to vector<2x8x8xbf16>
    %66 = vector.shape_cast %62 : vector<16x8xf32> to vector<2x8x8xf32>
    %67 = arith.truncf %66 : vector<2x8x8xf32> to vector<2x8x8xbf16>
    %68 = vector.shape_cast %63 : vector<16x8xf32> to vector<2x8x8xf32>
    %69 = arith.truncf %68 : vector<2x8x8xf32> to vector<2x8x8xbf16>
    "tpu.trace_start"() <{level = 10 : i32, message = "bqd,bkd->bqk"}> : () -> ()
    %cst_19 = arith.constant dense<0.000000e+00> : vector<2x8x8xf32>
    %70 = tpu.matmul %65, %67, %cst_19 {dimension_numbers = #tpu.dot_dimension_numbers<[2], [2], [1], [1], [0, 0, 0, 1, 1, 1], [0], [0]>} : vector<2x8x8xbf16>, vector<2x8x8xbf16>, vector<2x8x8xf32> -> vector<2x8x8xf32>
    "tpu.trace_stop"() : () -> ()
    %71 = arith.addf %70, %14 : vector<2x8x8xf32>
    %cst_20 = arith.constant dense<0xFF800000> : vector<2x8xf32>
    %72 = vector.multi_reduction <maximumf>, %71, %cst_20 [2] : vector<2x8x8xf32> to vector<2x8xf32>
    %73 = vector.shape_cast %72 : vector<2x8xf32> to vector<2x8x1xf32>
    %74 = vector.broadcast %73 : vector<2x8x1xf32> to vector<2x8x8xf32>
    %75 = arith.subf %71, %74 : vector<2x8x8xf32>
    %76 = math.exp %75 : vector<2x8x8xf32>
    %cst_21 = arith.constant dense<0.000000e+00> : vector<2x8xf32>
    %77 = vector.multi_reduction <add>, %76, %cst_21 [2] : vector<2x8x8xf32> to vector<2x8xf32>
    %78 = vector.shape_cast %77 : vector<2x8xf32> to vector<2x8x1xf32>
    %79 = tpu.reciprocal %78 {approx = true} : vector<2x8x1xf32> -> vector<2x8x1xf32>
    %80 = vector.broadcast %79 : vector<2x8x1xf32> to vector<2x8x8xf32>
    %81 = arith.mulf %76, %80 : vector<2x8x8xf32>
    %82 = arith.truncf %81 : vector<2x8x8xf32> to vector<2x8x8xbf16>
    "tpu.trace_start"() <{level = 10 : i32, message = "bqk,bkd->bqd"}> : () -> ()
    %cst_22 = arith.constant dense<0.000000e+00> : vector<2x8x8xf32>
    %83 = tpu.matmul %82, %69, %cst_22 {dimension_numbers = #tpu.dot_dimension_numbers<[2], [1], [1], [2], [0, 0, 0, 1, 1, 2], [0], [0]>} : vector<2x8x8xbf16>, vector<2x8x8xbf16>, vector<2x8x8xf32> -> vector<2x8x8xf32>
    "tpu.trace_stop"() : () -> ()
    %84 = vector.extract_strided_slice %11 {offsets = [0, 24], sizes = [16, 8], strides = [1, 1]} : vector<16x96xf32> to vector<16x8xf32>
    %85 = vector.extract_strided_slice %11 {offsets = [0, 56], sizes = [16, 8], strides = [1, 1]} : vector<16x96xf32> to vector<16x8xf32>
    %86 = vector.extract_strided_slice %11 {offsets = [0, 88], sizes = [16, 8], strides = [1, 1]} : vector<16x96xf32> to vector<16x8xf32>
    %87 = vector.shape_cast %84 : vector<16x8xf32> to vector<2x8x8xf32>
    %88 = arith.truncf %87 : vector<2x8x8xf32> to vector<2x8x8xbf16>
    %89 = vector.shape_cast %85 : vector<16x8xf32> to vector<2x8x8xf32>
    %90 = arith.truncf %89 : vector<2x8x8xf32> to vector<2x8x8xbf16>
    %91 = vector.shape_cast %86 : vector<16x8xf32> to vector<2x8x8xf32>
    %92 = arith.truncf %91 : vector<2x8x8xf32> to vector<2x8x8xbf16>
    "tpu.trace_start"() <{level = 10 : i32, message = "bqd,bkd->bqk"}> : () -> ()
    %cst_23 = arith.constant dense<0.000000e+00> : vector<2x8x8xf32>
    %93 = tpu.matmul %88, %90, %cst_23 {dimension_numbers = #tpu.dot_dimension_numbers<[2], [2], [1], [1], [0, 0, 0, 1, 1, 1], [0], [0]>} : vector<2x8x8xbf16>, vector<2x8x8xbf16>, vector<2x8x8xf32> -> vector<2x8x8xf32>
    "tpu.trace_stop"() : () -> ()
    %94 = arith.addf %93, %14 : vector<2x8x8xf32>
    %cst_24 = arith.constant dense<0xFF800000> : vector<2x8xf32>
    %95 = vector.multi_reduction <maximumf>, %94, %cst_24 [2] : vector<2x8x8xf32> to vector<2x8xf32>
    %96 = vector.shape_cast %95 : vector<2x8xf32> to vector<2x8x1xf32>
    %97 = vector.broadcast %96 : vector<2x8x1xf32> to vector<2x8x8xf32>
    %98 = arith.subf %94, %97 : vector<2x8x8xf32>
    %99 = math.exp %98 : vector<2x8x8xf32>
    %cst_25 = arith.constant dense<0.000000e+00> : vector<2x8xf32>
    %100 = vector.multi_reduction <add>, %99, %cst_25 [2] : vector<2x8x8xf32> to vector<2x8xf32>
    %101 = vector.shape_cast %100 : vector<2x8xf32> to vector<2x8x1xf32>
    %102 = tpu.reciprocal %101 {approx = true} : vector<2x8x1xf32> -> vector<2x8x1xf32>
    %103 = vector.broadcast %102 : vector<2x8x1xf32> to vector<2x8x8xf32>
    %104 = arith.mulf %99, %103 : vector<2x8x8xf32>
    %105 = arith.truncf %104 : vector<2x8x8xf32> to vector<2x8x8xbf16>
    "tpu.trace_start"() <{level = 10 : i32, message = "bqk,bkd->bqd"}> : () -> ()
    %cst_26 = arith.constant dense<0.000000e+00> : vector<2x8x8xf32>
    %106 = tpu.matmul %105, %92, %cst_26 {dimension_numbers = #tpu.dot_dimension_numbers<[2], [1], [1], [2], [0, 0, 0, 1, 1, 2], [0], [0]>} : vector<2x8x8xbf16>, vector<2x8x8xbf16>, vector<2x8x8xf32> -> vector<2x8x8xf32>
    "tpu.trace_stop"() : () -> ()
    %107 = tpu.concatenate %37, %60, %83, %106 in 2 : vector<2x8x8xf32>, vector<2x8x8xf32>, vector<2x8x8xf32>, vector<2x8x8xf32> -> vector<2x8x32xf32>
    %108 = vector.shape_cast %107 : vector<2x8x32xf32> to vector<16x32xf32>
    %109 = arith.truncf %108 : vector<16x32xf32> to vector<16x32xbf16>
    %c0_27 = arith.constant 0 : index
    %c0_28 = arith.constant 0 : index
    %c0_29 = arith.constant 0 : index
    %110 = vector.load %arg7[%c0_27, %c0_28, %c0_29] : memref<1x32x32xbf16, #tpu.memory_space<vmem>>, vector<1x32x32xbf16>
    %111 = vector.shape_cast %110 : vector<1x32x32xbf16> to vector<32x32xbf16>
    %cst_30 = arith.constant dense<0.000000e+00> : vector<16x32xf32>
    %112 = tpu.matmul %109, %111, %cst_30 {dimension_numbers = #tpu.dot_dimension_numbers<[1], [0], [0], [1], [0, 0, 1, 1], [], []>} : vector<16x32xbf16>, vector<32x32xbf16>, vector<16x32xf32> -> vector<16x32xf32>
    %c0_31 = arith.constant 0 : index
    %c0_32 = arith.constant 0 : index
    %c0_33 = arith.constant 0 : index
    %113 = vector.load %arg8[%c0_31, %c0_32, %c0_33] : memref<1x1x32xf32, #tpu.memory_space<vmem>>, vector<1x1x32xf32>
    %114 = vector.shape_cast %113 : vector<1x1x32xf32> to vector<1x32xf32>
    %115 = vector.broadcast %114 : vector<1x32xf32> to vector<16x32xf32>
    %116 = arith.addf %112, %115 : vector<16x32xf32>
    %117 = arith.addf %116, %3 : vector<16x32xf32>
    %c0_34 = arith.constant 0 : index
    %c0_35 = arith.constant 0 : index
    %c0_36 = arith.constant 0 : index
    %118 = vector.load %arg9[%c0_34, %c0_35, %c0_36] : memref<1x1x32xf32, #tpu.memory_space<vmem>>, vector<1x1x32xf32>
    %119 = vector.shape_cast %118 : vector<1x1x32xf32> to vector<1x32xf32>
    %c0_37 = arith.constant 0 : index
    %c0_38 = arith.constant 0 : index
    %c0_39 = arith.constant 0 : index
    %120 = vector.load %arg10[%c0_37, %c0_38, %c0_39] : memref<1x1x32xf32, #tpu.memory_space<vmem>>, vector<1x1x32xf32>
    %121 = vector.shape_cast %120 : vector<1x1x32xf32> to vector<1x32xf32>
    %cst_40 = arith.constant dense<0.000000e+00> : vector<16xf32>
    %122 = vector.multi_reduction <add>, %117, %cst_40 [1] : vector<16x32xf32> to vector<16xf32>
    %123 = vector.shape_cast %122 : vector<16xf32> to vector<16x1xf32>
    %cst_41 = arith.constant 3.200000e+01 : f32
    %124 = vector.broadcast %cst_41 : f32 to vector<16x1xf32>
    %125 = arith.divf %123, %124 : vector<16x1xf32>
    %126 = arith.mulf %117, %117 : vector<16x32xf32>
    %cst_42 = arith.constant dense<0.000000e+00> : vector<16xf32>
    %127 = vector.multi_reduction <add>, %126, %cst_42 [1] : vector<16x32xf32> to vector<16xf32>
    %128 = vector.shape_cast %127 : vector<16xf32> to vector<16x1xf32>
    %cst_43 = arith.constant 3.200000e+01 : f32
    %129 = vector.broadcast %cst_43 : f32 to vector<16x1xf32>
    %130 = arith.divf %128, %129 : vector<16x1xf32>
    %131 = arith.mulf %125, %125 : vector<16x1xf32>
    %132 = arith.subf %130, %131 : vector<16x1xf32>
    %133 = vector.broadcast %125 : vector<16x1xf32> to vector<16x32xf32>
    %134 = arith.subf %117, %133 : vector<16x32xf32>
    %cst_44 = arith.constant 9.99999996E-13 : f32
    %135 = vector.broadcast %cst_44 : f32 to vector<16x1xf32>
    %136 = arith.addf %132, %135 : vector<16x1xf32>
    %137 = math.rsqrt %136 : vector<16x1xf32>
    %138 = vector.broadcast %137 : vector<16x1xf32> to vector<16x32xf32>
    %139 = arith.mulf %134, %138 : vector<16x32xf32>
    %140 = vector.broadcast %119 : vector<1x32xf32> to vector<16x32xf32>
    %141 = arith.mulf %139, %140 : vector<16x32xf32>
    %142 = vector.broadcast %121 : vector<1x32xf32> to vector<16x32xf32>
    %143 = arith.addf %141, %142 : vector<16x32xf32>
    %144 = arith.truncf %143 : vector<16x32xf32> to vector<16x32xbf16>
    %c0_45 = arith.constant 0 : index
    %c0_46 = arith.constant 0 : index
    %c0_47 = arith.constant 0 : index
    %145 = vector.load %arg11[%c0_45, %c0_46, %c0_47] : memref<1x32x64xbf16, #tpu.memory_space<vmem>>, vector<1x32x64xbf16>
    %146 = vector.shape_cast %145 : vector<1x32x64xbf16> to vector<32x64xbf16>
    %cst_48 = arith.constant dense<0.000000e+00> : vector<16x64xf32>
    %147 = tpu.matmul %144, %146, %cst_48 {dimension_numbers = #tpu.dot_dimension_numbers<[1], [0], [0], [1], [0, 0, 1, 1], [], []>} : vector<16x32xbf16>, vector<32x64xbf16>, vector<16x64xf32> -> vector<16x64xf32>
    %c0_49 = arith.constant 0 : index
    %c0_50 = arith.constant 0 : index
    %c0_51 = arith.constant 0 : index
    %148 = vector.load %arg12[%c0_49, %c0_50, %c0_51] : memref<1x1x64xf32, #tpu.memory_space<vmem>>, vector<1x1x64xf32>
    %149 = vector.shape_cast %148 : vector<1x1x64xf32> to vector<1x64xf32>
    %150 = vector.broadcast %149 : vector<1x64xf32> to vector<16x64xf32>
    %151 = arith.addf %147, %150 : vector<16x64xf32>
    %152 = arith.mulf %151, %151 : vector<16x64xf32>
    %153 = arith.mulf %151, %152 : vector<16x64xf32>
    %cst_52 = arith.constant 4.471500e-02 : f32
    %154 = vector.broadcast %cst_52 : f32 to vector<16x64xf32>
    %155 = arith.mulf %154, %153 : vector<16x64xf32>
    %156 = arith.addf %151, %155 : vector<16x64xf32>
    %cst_53 = arith.constant 0.797884583 : f32
    %157 = vector.broadcast %cst_53 : f32 to vector<16x64xf32>
    %158 = arith.mulf %157, %156 : vector<16x64xf32>
    %159 = math.tanh %158 : vector<16x64xf32>
    %cst_54 = arith.constant 1.000000e+00 : f32
    %160 = vector.broadcast %cst_54 : f32 to vector<16x64xf32>
    %161 = arith.addf %160, %159 : vector<16x64xf32>
    %cst_55 = arith.constant 5.000000e-01 : f32
    %162 = vector.broadcast %cst_55 : f32 to vector<16x64xf32>
    %163 = arith.mulf %162, %161 : vector<16x64xf32>
    %164 = arith.mulf %151, %163 : vector<16x64xf32>
    %165 = arith.truncf %164 : vector<16x64xf32> to vector<16x64xbf16>
    %c0_56 = arith.constant 0 : index
    %c0_57 = arith.constant 0 : index
    %c0_58 = arith.constant 0 : index
    %166 = vector.load %arg13[%c0_56, %c0_57, %c0_58] : memref<1x64x32xbf16, #tpu.memory_space<vmem>>, vector<1x64x32xbf16>
    %167 = vector.shape_cast %166 : vector<1x64x32xbf16> to vector<64x32xbf16>
    %cst_59 = arith.constant dense<0.000000e+00> : vector<16x32xf32>
    %168 = tpu.matmul %165, %167, %cst_59 {dimension_numbers = #tpu.dot_dimension_numbers<[1], [0], [0], [1], [0, 0, 1, 1], [], []>} : vector<16x64xbf16>, vector<64x32xbf16>, vector<16x32xf32> -> vector<16x32xf32>
    %c0_60 = arith.constant 0 : index
    %c0_61 = arith.constant 0 : index
    %c0_62 = arith.constant 0 : index
    %169 = vector.load %arg14[%c0_60, %c0_61, %c0_62] : memref<1x1x32xf32, #tpu.memory_space<vmem>>, vector<1x1x32xf32>
    %170 = vector.shape_cast %169 : vector<1x1x32xf32> to vector<1x32xf32>
    %171 = vector.broadcast %170 : vector<1x32xf32> to vector<16x32xf32>
    %172 = arith.addf %168, %171 : vector<16x32xf32>
    %173 = arith.addf %172, %143 : vector<16x32xf32>
    %c0_63 = arith.constant 0 : index
    %c0_64 = arith.constant 0 : index
    %c0_65 = arith.constant 0 : index
    %174 = vector.load %arg15[%c0_63, %c0_64, %c0_65] : memref<1x1x32xf32, #tpu.memory_space<vmem>>, vector<1x1x32xf32>
    %175 = vector.shape_cast %174 : vector<1x1x32xf32> to vector<1x32xf32>
    %c0_66 = arith.constant 0 : index
    %c0_67 = arith.constant 0 : index
    %c0_68 = arith.constant 0 : index
    %176 = vector.load %arg16[%c0_66, %c0_67, %c0_68] : memref<1x1x32xf32, #tpu.memory_space<vmem>>, vector<1x1x32xf32>
    %177 = vector.shape_cast %176 : vector<1x1x32xf32> to vector<1x32xf32>
    %cst_69 = arith.constant dense<0.000000e+00> : vector<16xf32>
    %178 = vector.multi_reduction <add>, %173, %cst_69 [1] : vector<16x32xf32> to vector<16xf32>
    %179 = vector.shape_cast %178 : vector<16xf32> to vector<16x1xf32>
    %cst_70 = arith.constant 3.200000e+01 : f32
    %180 = vector.broadcast %cst_70 : f32 to vector<16x1xf32>
    %181 = arith.divf %179, %180 : vector<16x1xf32>
    %182 = arith.mulf %173, %173 : vector<16x32xf32>
    %cst_71 = arith.constant dense<0.000000e+00> : vector<16xf32>
    %183 = vector.multi_reduction <add>, %182, %cst_71 [1] : vector<16x32xf32> to vector<16xf32>
    %184 = vector.shape_cast %183 : vector<16xf32> to vector<16x1xf32>
    %cst_72 = arith.constant 3.200000e+01 : f32
    %185 = vector.broadcast %cst_72 : f32 to vector<16x1xf32>
    %186 = arith.divf %184, %185 : vector<16x1xf32>
    %187 = arith.mulf %181, %181 : vector<16x1xf32>
    %188 = arith.subf %186, %187 : vector<16x1xf32>
    %189 = vector.broadcast %181 : vector<16x1xf32> to vector<16x32xf32>
    %190 = arith.subf %173, %189 : vector<16x32xf32>
    %cst_73 = arith.constant 9.99999996E-13 : f32
    %191 = vector.broadcast %cst_73 : f32 to vector<16x1xf32>
    %192 = arith.addf %188, %191 : vector<16x1xf32>
    %193 = math.rsqrt %192 : vector<16x1xf32>
    %194 = vector.broadcast %193 : vector<16x1xf32> to vector<16x32xf32>
    %195 = arith.mulf %190, %194 : vector<16x32xf32>
    %196 = vector.broadcast %175 : vector<1x32xf32> to vector<16x32xf32>
    %197 = arith.mulf %195, %196 : vector<16x32xf32>
    %198 = vector.broadcast %177 : vector<1x32xf32> to vector<16x32xf32>
    %199 = arith.addf %197, %198 : vector<16x32xf32>
    %c0_74 = arith.constant 0 : index
    %c0_75 = arith.constant 0 : index
    %200 = vector.load %arg18[%c0_74, %c0_75] : memref<16x32xf32, #tpu.memory_space<vmem>>, vector<16x32xf32>
    tpu.vector_store %arg18[%c0_74, %c0_75], %199 {strides = array<i32>} : memref<16x32xf32, #tpu.memory_space<vmem>>, vector<16x32xf32>,
    %c1_i32 = arith.constant 1 : i32
    %201 = arith.cmpi eq, %arg0, %c1_i32 : i32
    %202 = arith.extui %201 : i1 to i32
    %c0_i32_76 = arith.constant 0 : i32
    %203 = arith.cmpi ne, %202, %c0_i32_76 : i32
    scf.if %203 {
      %204 = vector.shape_cast %199 : vector<16x32xf32> to vector<2x8x32xf32>
      %cst_77 = arith.constant dense<0.000000e+00> : vector<2x32xf32>
      %205 = vector.multi_reduction <add>, %204, %cst_77 [1] : vector<2x8x32xf32> to vector<2x32xf32>
      %cst_78 = arith.constant 8.000000e+00 : f32
      %206 = vector.broadcast %cst_78 : f32 to vector<2x32xf32>
      %207 = arith.divf %205, %206 : vector<2x32xf32>
      %c0_79 = arith.constant 0 : index
      %c0_80 = arith.constant 0 : index
      %208 = vector.load %arg17[%c0_79, %c0_80] : memref<2x32xf32, #tpu.memory_space<vmem>>, vector<2x32xf32>
      tpu.vector_store %arg17[%c0_79, %c0_80], %207 {strides = array<i32>} : memref<2x32xf32, #tpu.memory_space<vmem>>, vector<2x32xf32>,
    } else {
    }
    return
  }
  func.func @transform_0(%arg0: i32) -> (i32, i32) {
    %c0_i32 = arith.constant 0 : i32
    %c0_i32_0 = arith.constant 0 : i32
    %c0_i32_1 = arith.constant 0 : i32
    return %c0_i32, %c0_i32_0 : i32, i32
  }
  func.func @transform_1(%arg0: i32) -> (i32, i32, i32) {
    %c0_i32 = arith.constant 0 : i32
    %c0_i32_0 = arith.constant 0 : i32
    %c0_i32_1 = arith.constant 0 : i32
    %c0_i32_2 = arith.constant 0 : i32
    return %c0_i32, %c0_i32_0, %c0_i32_1 : i32, i32, i32
  }
  func.func @transform_2(%arg0: i32) -> (i32, i32) {
    %c0_i32 = arith.constant 0 : i32
    %c0_i32_0 = arith.constant 0 : i32
    %c0_i32_1 = arith.constant 0 : i32
    return %c0_i32, %c0_i32_0 : i32, i32
  }
  func.func @transform_3(%arg0: i32) -> (i32, i32) {
    %c0_i32 = arith.constant 0 : i32
    %c0_i32_0 = arith.constant 0 : i32
    %c0_i32_1 = arith.constant 0 : i32
    return %c0_i32, %c0_i32_0 : i32, i32
  }
  func.func @transform_4(%arg0: i32) -> (i32, i32, i32) {
    %c0_i32 = arith.constant 0 : i32
    %c0_i32_0 = arith.constant 0 : i32
    %c0_i32_1 = arith.constant 0 : i32
    return %arg0, %c0_i32, %c0_i32_0 : i32, i32, i32
  }
  func.func @transform_5(%arg0: i32) -> (i32, i32, i32) {
    %c0_i32 = arith.constant 0 : i32
    %c0_i32_0 = arith.constant 0 : i32
    %c0_i32_1 = arith.constant 0 : i32
    return %arg0, %c0_i32, %c0_i32_0 : i32, i32, i32
  }
  func.func @transform_6(%arg0: i32) -> (i32, i32, i32) {
    %c0_i32 = arith.constant 0 : i32
    %c0_i32_0 = arith.constant 0 : i32
    %c0_i32_1 = arith.constant 0 : i32
    return %arg0, %c0_i32, %c0_i32_0 : i32, i32, i32
  }
  func.func @transform_7(%arg0: i32) -> (i32, i32, i32) {
    %c0_i32 = arith.constant 0 : i32
    %c0_i32_0 = arith.constant 0 : i32
    %c0_i32_1 = arith.constant 0 : i32
    return %arg0, %c0_i32, %c0_i32_0 : i32, i32, i32
  }
  func.func @transform_8(%arg0: i32) -> (i32, i32, i32) {
    %c0_i32 = arith.constant 0 : i32
    %c0_i32_0 = arith.constant 0 : i32
    %c0_i32_1 = arith.constant 0 : i32
    return %arg0, %c0_i32, %c0_i32_0 : i32, i32, i32
  }
  func.func @transform_9(%arg0: i32) -> (i32, i32, i32) {
    %c0_i32 = arith.constant 0 : i32
    %c0_i32_0 = arith.constant 0 : i32
    %c0_i32_1 = arith.constant 0 : i32
    return %arg0, %c0_i32, %c0_i32_0 : i32, i32, i32
  }
  func.func @transform_10(%arg0: i32) -> (i32, i32, i32) {
    %c0_i32 = arith.constant 0 : i32
    %c0_i32_0 = arith.constant 0 : i32
    %c0_i32_1 = arith.constant 0 : i32
    return %arg0, %c0_i32, %c0_i32_0 : i32, i32, i32
  }
  func.func @transform_11(%arg0: i32) -> (i32, i32, i32) {
    %c0_i32 = arith.constant 0 : i32
    %c0_i32_0 = arith.constant 0 : i32
    %c0_i32_1 = arith.constant 0 : i32
    return %arg0, %c0_i32, %c0_i32_0 : i32, i32, i32
  }
  func.func @transform_12(%arg0: i32) -> (i32, i32, i32) {
    %c0_i32 = arith.constant 0 : i32
    %c0_i32_0 = arith.constant 0 : i32
    %c0_i32_1 = arith.constant 0 : i32
    return %arg0, %c0_i32, %c0_i32_0 : i32, i32, i32
  }
  func.func @transform_13(%arg0: i32) -> (i32, i32, i32) {
    %c0_i32 = arith.constant 0 : i32
    %c0_i32_0 = arith.constant 0 : i32
    %c0_i32_1 = arith.constant 0 : i32
    return %arg0, %c0_i32, %c0_i32_0 : i32, i32, i32
  }
  func.func @transform_14(%arg0: i32) -> (i32, i32, i32) {
    %c0_i32 = arith.constant 0 : i32
    %c0_i32_0 = arith.constant 0 : i32
    %c0_i32_1 = arith.constant 0 : i32
    return %arg0, %c0_i32, %c0_i32_0 : i32, i32, i32
  }
  func.func @transform_15(%arg0: i32) -> (i32, i32, i32) {
    %c0_i32 = arith.constant 0 : i32
    %c0_i32_0 = arith.constant 0 : i32
    %c0_i32_1 = arith.constant 0 : i32
    return %arg0, %c0_i32, %c0_i32_0 : i32, i32, i32
  }
  func.func @transform_16(%arg0: i32) -> (i32, i32) {
    %c0_i32 = arith.constant 0 : i32
    %c0_i32_0 = arith.constant 0 : i32
    %c0_i32_1 = arith.constant 0 : i32
    return %c0_i32, %c0_i32_0 : i32, i32
  }
}

</mosaic_0001>

<llo_original>
// kernel: sentence_transformer_forward.1
$region0: #{sentence_transformer_forward.1}
  #allocation0 [shape = 'u32[]', space=smem, size = 0x4, offset = 0x4, fixed_abs, tag = 'smem constant byte address 0x4 - core index']
  #allocation1 [shape = 'u32[144,128]{1,0:T(1,128)}', space=vmem, size = 0x12000, scoped, tag = 'internal scratch']
  #allocation2 [shape = 'f32[16,32]{1,0:T(8,128)}', space=vmem, size = 0x2000, scoped, tag = 'scratch operand']
  %s0 = inlined_call_operand.vmem [shape: f32[16,32], index: 0, kind: input, shape index: {}]
  %s1 = inlined_call_operand.vmem [shape: f32[2,1,8], index: 1, kind: input, shape index: {}]
  %s2 = inlined_call_operand.vmem [shape: f32[1,32], index: 2, kind: input, shape index: {}]
  %s3 = inlined_call_operand.vmem [shape: f32[1,32], index: 3, kind: input, shape index: {}]
  %s4 = inlined_call_operand.vmem [shape: bf16[2,32,96], index: 4, kind: input, shape index: {}]
  %s5 = inlined_call_operand.vmem [shape: f32[2,1,96], index: 5, kind: input, shape index: {}]
  %s6 = inlined_call_operand.vmem [shape: bf16[2,32,32], index: 6, kind: input, shape index: {}]
  %s7 = inlined_call_operand.vmem [shape: f32[2,1,32], index: 7, kind: input, shape index: {}]
  %s8 = inlined_call_operand.vmem [shape: f32[2,1,32], index: 8, kind: input, shape index: {}]
  %s9 = inlined_call_operand.vmem [shape: f32[2,1,32], index: 9, kind: input, shape index: {}]
  %s10 = inlined_call_operand.vmem [shape: bf16[2,32,64], index: 10, kind: input, shape index: {}]
  %s11 = inlined_call_operand.vmem [shape: f32[2,1,64], index: 11, kind: input, shape index: {}]
  %s12 = inlined_call_operand.vmem [shape: bf16[2,64,32], index: 12, kind: input, shape index: {}]
  %s13 = inlined_call_operand.vmem [shape: f32[2,1,32], index: 13, kind: input, shape index: {}]
  %s14 = inlined_call_operand.vmem [shape: f32[2,1,32], index: 14, kind: input, shape index: {}]
  %s15 = inlined_call_operand.vmem [shape: f32[2,1,32], index: 15, kind: input, shape index: {}]
  %s16 = inlined_call_operand.hbm [shape: f32[2,32], index: 16, kind: output, shape index: {}]
  %s17 = sld [smem:[#allocation0]]
  $region105: #{sentence_transformer_forward.1} parent=0
    _
  %s19 = ssub.s32 1, %s17
  %s20 = scalar_select 0, %s19, %s17
  $region1: #{sentence_transformer_forward.1} parent=0
    #allocation3 [shape = 'u8[1024]{0}', space=vmem, size = 0x400, scoped, tag = 'output window, operand 0, single buffered']
    #allocation4 [shape = 's32[2]{0}', space=sflag, size = 0x8, scoped, tag = 'scoped memory for sentence_transformer_forward.1']
    %21 = vsyncpa [#allocation4], 0
    loop: start=0, step=1, limit=4
    $region2: #{sentence_transformer_forward.1} parent=1 // loop_pre_header
      _
    $region3: #{sentence_transformer_forward.1} parent=1 // loop_header
      %s23 = sphi 0, %s27
      %p24 = scmp.ge.s32.totalorder %s23, 4
      %s31 = sphi 0, %s31
      %s33 = sphi 0, %s31
      %s34 = sphi 0, %s33
      %s48 = sphi 0, %s34
      %s52 = sphi 0, %s52
      %s54 = sphi 0, %s52
      %s55 = sphi 0, %s54
      %s69 = sphi 0, %s55
      %s73 = sphi 0, %s73
      %s75 = sphi 0, %s73
      %s76 = sphi 0, %s75
      %s90 = sphi 0, %s76
      %s94 = sphi 0, %s94
      %s96 = sphi 0, %s94
      %s97 = sphi 0, %s96
      %s111 = sphi 0, %s97
      %s117 = sphi 0, %s119
      %s120 = sphi 0, %s117
      %s121 = sphi 0, %s120
      %s137 = sphi 0, %s121
      %s143 = sphi 0, %s145
      %s146 = sphi 0, %s143
      %s147 = sphi 0, %s146
      %s163 = sphi 0, %s147
      %s169 = sphi 0, %s171
      %s172 = sphi 0, %s169
      %s173 = sphi 0, %s172
      %s189 = sphi 0, %s173
      %s195 = sphi 0, %s197
      %s198 = sphi 0, %s195
      %s199 = sphi 0, %s198
      %s215 = sphi 0, %s199
      %s221 = sphi 0, %s223
      %s224 = sphi 0, %s221
      %s225 = sphi 0, %s224
      %s241 = sphi 0, %s225
      %s247 = sphi 0, %s249
      %s250 = sphi 0, %s247
      %s251 = sphi 0, %s250
      %s267 = sphi 0, %s251
      %s273 = sphi 0, %s275
      %s276 = sphi 0, %s273
      %s277 = sphi 0, %s276
      %s293 = sphi 0, %s277
      %s299 = sphi 0, %s301
      %s302 = sphi 0, %s299
      %s303 = sphi 0, %s302
      %s319 = sphi 0, %s303
      %s325 = sphi 0, %s327
      %s328 = sphi 0, %s325
      %s329 = sphi 0, %s328
      %s345 = sphi 0, %s329
      %s351 = sphi 0, %s353
      %s354 = sphi 0, %s351
      %s355 = sphi 0, %s354
      %s371 = sphi 0, %s355
      %s377 = sphi 0, %s379
      %s380 = sphi 0, %s377
      %s381 = sphi 0, %s380
      %s397 = sphi 0, %s381
      %s403 = sphi 0, %s405
      %s406 = sphi 0, %s403
      %s407 = sphi 0, %s406
      %s423 = sphi 0, %s407
      %s427 = sphi 0, %s427
      %s429 = sphi 0, %s427
      %s430 = sphi 0, %s429
      %s444 = sphi 0, %s430
    $region4: #{sentence_transformer_forward.1} parent=1 // loop_header_branch
      %26 = sbr.rel (%p24) target = $region8
    $region5: #{sentence_transformer_forward.1} parent=1 // loop_body
      %s28 = ssub.s32 %s23, 1
      %s29 = ssub.s32 %s23, 2
      %s30 = sadd.s32 %s23, 1
      %s32 = sadd.s32 %s31, 1
      %p35 = scmp.eq.s32.totalorder %s23, 1
      %p36 = scmp.ne.s32.totalorder %s31, %s33
      %p37 = scmp.eq.s32.totalorder %s23, 0
      %p38 = por %p36, %p37
      %p39 = scmp.ne.s32.totalorder %s31, %s33
      %p40 = scmp.eq.s32.totalorder %s28, 1
      %p41 = por %p39, %p40
      %p42 = scmp.ne.s32.totalorder %s33, %s34
      %p43 = scmp.eq.s32.totalorder %s28, 0
      %p44 = por %p42, %p43
      %p45 = scmp.ne.s32.totalorder %s33, %s34
      %p46 = scmp.eq.s32.totalorder %s29, 1
      %p47 = por %p45, %p46
      %p49 = scmp.ne.s32.totalorder %s34, %s48
      %p50 = scmp.eq.s32.totalorder %s29, 0
      %p51 = por %p49, %p50
      %s53 = sadd.s32 %s52, 1
      %p56 = scmp.eq.s32.totalorder %s23, 1
      %p57 = scmp.ne.s32.totalorder %s52, %s54
      %p58 = scmp.eq.s32.totalorder %s23, 0
      %p59 = por %p57, %p58
      %p60 = scmp.ne.s32.totalorder %s52, %s54
      %p61 = scmp.eq.s32.totalorder %s28, 1
      %p62 = por %p60, %p61
      %p63 = scmp.ne.s32.totalorder %s54, %s55
      %p64 = scmp.eq.s32.totalorder %s28, 0
      %p65 = por %p63, %p64
      %p66 = scmp.ne.s32.totalorder %s54, %s55
      %p67 = scmp.eq.s32.totalorder %s29, 1
      %p68 = por %p66, %p67
      %p70 = scmp.ne.s32.totalorder %s55, %s69
      %p71 = scmp.eq.s32.totalorder %s29, 0
      %p72 = por %p70, %p71
      %s74 = sadd.s32 %s73, 1
      %p77 = scmp.eq.s32.totalorder %s23, 1
      %p78 = scmp.ne.s32.totalorder %s73, %s75
      %p79 = scmp.eq.s32.totalorder %s23, 0
      %p80 = por %p78, %p79
      %p81 = scmp.ne.s32.totalorder %s73, %s75
      %p82 = scmp.eq.s32.totalorder %s28, 1
      %p83 = por %p81, %p82
      %p84 = scmp.ne.s32.totalorder %s75, %s76
      %p85 = scmp.eq.s32.totalorder %s28, 0
      %p86 = por %p84, %p85
      %p87 = scmp.ne.s32.totalorder %s75, %s76
      %p88 = scmp.eq.s32.totalorder %s29, 1
      %p89 = por %p87, %p88
      %p91 = scmp.ne.s32.totalorder %s76, %s90
      %p92 = scmp.eq.s32.totalorder %s29, 0
      %p93 = por %p91, %p92
      %s95 = sadd.s32 %s94, 1
      %p98 = scmp.eq.s32.totalorder %s23, 1
      %p99 = scmp.ne.s32.totalorder %s94, %s96
      %p100 = scmp.eq.s32.totalorder %s23, 0
      %p101 = por %p99, %p100
      %p102 = scmp.ne.s32.totalorder %s94, %s96
      %p103 = scmp.eq.s32.totalorder %s28, 1
      %p104 = por %p102, %p103
      %p105 = scmp.ne.s32.totalorder %s96, %s97
      %p106 = scmp.eq.s32.totalorder %s28, 0
      %p107 = por %p105, %p106
      %p108 = scmp.ne.s32.totalorder %s96, %s97
      %p109 = scmp.eq.s32.totalorder %s29, 1
      %p110 = por %p108, %p109
      %p112 = scmp.ne.s32.totalorder %s97, %s111
      %p113 = scmp.eq.s32.totalorder %s29, 0
      %p114 = por %p112, %p113
      %s115 = ssub.s32 %s23, %s30
      %p116 = scmp.eq.s32.totalorder %s115, 0
      %s118 = sadd.s32 %s117, 1
      %s119 = scalar_select %p116, %s117, %s118
      %p122 = pneg %p116
      %p123 = scmp.eq.s32.totalorder %s23, 1
      %p124 = por %p122, %p123
      %p125 = scmp.ne.s32.totalorder %s117, %s120
      %p126 = scmp.eq.s32.totalorder %s23, 0
      %p127 = por %p125, %p126
      %p128 = scmp.ne.s32.totalorder %s117, %s120
      %p129 = scmp.eq.s32.totalorder %s28, 1
      %p130 = por %p128, %p129
      %p131 = scmp.ne.s32.totalorder %s120, %s121
      %p132 = scmp.eq.s32.totalorder %s28, 0
      %p133 = por %p131, %p132
      %p134 = scmp.ne.s32.totalorder %s120, %s121
      %p135 = scmp.eq.s32.totalorder %s29, 1
      %p136 = por %p134, %p135
      %p138 = scmp.ne.s32.totalorder %s121, %s137
      %p139 = scmp.eq.s32.totalorder %s29, 0
      %p140 = por %p138, %p139
      %s141 = ssub.s32 %s23, %s30
      %p142 = scmp.eq.s32.totalorder %s141, 0
      %s144 = sadd.s32 %s143, 1
      %s145 = scalar_select %p142, %s143, %s144
      %p148 = pneg %p142
      %p149 = scmp.eq.s32.totalorder %s23, 1
      %p150 = por %p148, %p149
      %p151 = scmp.ne.s32.totalorder %s143, %s146
      %p152 = scmp.eq.s32.totalorder %s23, 0
      %p153 = por %p151, %p152
      %p154 = scmp.ne.s32.totalorder %s143, %s146
      %p155 = scmp.eq.s32.totalorder %s28, 1
      %p156 = por %p154, %p155
      %p157 = scmp.ne.s32.totalorder %s146, %s147
      %p158 = scmp.eq.s32.totalorder %s28, 0
      %p159 = por %p157, %p158
      %p160 = scmp.ne.s32.totalorder %s146, %s147
      %p161 = scmp.eq.s32.totalorder %s29, 1
      %p162 = por %p160, %p161
      %p164 = scmp.ne.s32.totalorder %s147, %s163
      %p165 = scmp.eq.s32.totalorder %s29, 0
      %p166 = por %p164, %p165
      %s167 = ssub.s32 %s23, %s30
      %p168 = scmp.eq.s32.totalorder %s167, 0
      %s170 = sadd.s32 %s169, 1
      %s171 = scalar_select %p168, %s169, %s170
      %p174 = pneg %p168
      %p175 = scmp.eq.s32.totalorder %s23, 1
      %p176 = por %p174, %p175
      %p177 = scmp.ne.s32.totalorder %s169, %s172
      %p178 = scmp.eq.s32.totalorder %s23, 0
      %p179 = por %p177, %p178
      %p180 = scmp.ne.s32.totalorder %s169, %s172
      %p181 = scmp.eq.s32.totalorder %s28, 1
      %p182 = por %p180, %p181
      %p183 = scmp.ne.s32.totalorder %s172, %s173
      %p184 = scmp.eq.s32.totalorder %s28, 0
      %p185 = por %p183, %p184
      %p186 = scmp.ne.s32.totalorder %s172, %s173
      %p187 = scmp.eq.s32.totalorder %s29, 1
      %p188 = por %p186, %p187
      %p190 = scmp.ne.s32.totalorder %s173, %s189
      %p191 = scmp.eq.s32.totalorder %s29, 0
      %p192 = por %p190, %p191
      %s193 = ssub.s32 %s23, %s30
      %p194 = scmp.eq.s32.totalorder %s193, 0
      %s196 = sadd.s32 %s195, 1
      %s197 = scalar_select %p194, %s195, %s196
      %p200 = pneg %p194
      %p201 = scmp.eq.s32.totalorder %s23, 1
      %p202 = por %p200, %p201
      %p203 = scmp.ne.s32.totalorder %s195, %s198
      %p204 = scmp.eq.s32.totalorder %s23, 0
      %p205 = por %p203, %p204
      %p206 = scmp.ne.s32.totalorder %s195, %s198
      %p207 = scmp.eq.s32.totalorder %s28, 1
      %p208 = por %p206, %p207
      %p209 = scmp.ne.s32.totalorder %s198, %s199
      %p210 = scmp.eq.s32.totalorder %s28, 0
      %p211 = por %p209, %p210
      %p212 = scmp.ne.s32.totalorder %s198, %s199
      %p213 = scmp.eq.s32.totalorder %s29, 1
      %p214 = por %p212, %p213
      %p216 = scmp.ne.s32.totalorder %s199, %s215
      %p217 = scmp.eq.s32.totalorder %s29, 0
      %p218 = por %p216, %p217
      %s219 = ssub.s32 %s23, %s30
      %p220 = scmp.eq.s32.totalorder %s219, 0
      %s222 = sadd.s32 %s221, 1
      %s223 = scalar_select %p220, %s221, %s222
      %p226 = pneg %p220
      %p227 = scmp.eq.s32.totalorder %s23, 1
      %p228 = por %p226, %p227
      %p229 = scmp.ne.s32.totalorder %s221, %s224
      %p230 = scmp.eq.s32.totalorder %s23, 0
      %p231 = por %p229, %p230
      %p232 = scmp.ne.s32.totalorder %s221, %s224
      %p233 = scmp.eq.s32.totalorder %s28, 1
      %p234 = por %p232, %p233
      %p235 = scmp.ne.s32.totalorder %s224, %s225
      %p236 = scmp.eq.s32.totalorder %s28, 0
      %p237 = por %p235, %p236
      %p238 = scmp.ne.s32.totalorder %s224, %s225
      %p239 = scmp.eq.s32.totalorder %s29, 1
      %p240 = por %p238, %p239
      %p242 = scmp.ne.s32.totalorder %s225, %s241
      %p243 = scmp.eq.s32.totalorder %s29, 0
      %p244 = por %p242, %p243
      %s245 = ssub.s32 %s23, %s30
      %p246 = scmp.eq.s32.totalorder %s245, 0
      %s248 = sadd.s32 %s247, 1
      %s249 = scalar_select %p246, %s247, %s248
      %p252 = pneg %p246
      %p253 = scmp.eq.s32.totalorder %s23, 1
      %p254 = por %p252, %p253
      %p255 = scmp.ne.s32.totalorder %s247, %s250
      %p256 = scmp.eq.s32.totalorder %s23, 0
      %p257 = por %p255, %p256
      %p258 = scmp.ne.s32.totalorder %s247, %s250
      %p259 = scmp.eq.s32.totalorder %s28, 1
      %p260 = por %p258, %p259
      %p261 = scmp.ne.s32.totalorder %s250, %s251
      %p262 = scmp.eq.s32.totalorder %s28, 0
      %p263 = por %p261, %p262
      %p264 = scmp.ne.s32.totalorder %s250, %s251
      %p265 = scmp.eq.s32.totalorder %s29, 1
      %p266 = por %p264, %p265
      %p268 = scmp.ne.s32.totalorder %s251, %s267
      %p269 = scmp.eq.s32.totalorder %s29, 0
      %p270 = por %p268, %p269
      %s271 = ssub.s32 %s23, %s30
      %p272 = scmp.eq.s32.totalorder %s271, 0
      %s274 = sadd.s32 %s273, 1
      %s275 = scalar_select %p272, %s273, %s274
      %p278 = pneg %p272
      %p279 = scmp.eq.s32.totalorder %s23, 1
      %p280 = por %p278, %p279
      %p281 = scmp.ne.s32.totalorder %s273, %s276
      %p282 = scmp.eq.s32.totalorder %s23, 0
      %p283 = por %p281, %p282
      %p284 = scmp.ne.s32.totalorder %s273, %s276
      %p285 = scmp.eq.s32.totalorder %s28, 1
      %p286 = por %p284, %p285
      %p287 = scmp.ne.s32.totalorder %s276, %s277
      %p288 = scmp.eq.s32.totalorder %s28, 0
      %p289 = por %p287, %p288
      %p290 = scmp.ne.s32.totalorder %s276, %s277
      %p291 = scmp.eq.s32.totalorder %s29, 1
      %p292 = por %p290, %p291
      %p294 = scmp.ne.s32.totalorder %s277, %s293
      %p295 = scmp.eq.s32.totalorder %s29, 0
      %p296 = por %p294, %p295
      %s297 = ssub.s32 %s23, %s30
      %p298 = scmp.eq.s32.totalorder %s297, 0
      %s300 = sadd.s32 %s299, 1
      %s301 = scalar_select %p298, %s299, %s300
      %p304 = pneg %p298
      %p305 = scmp.eq.s32.totalorder %s23, 1
      %p306 = por %p304, %p305
      %p307 = scmp.ne.s32.totalorder %s299, %s302
      %p308 = scmp.eq.s32.totalorder %s23, 0
      %p309 = por %p307, %p308
      %p310 = scmp.ne.s32.totalorder %s299, %s302
      %p311 = scmp.eq.s32.totalorder %s28, 1
      %p312 = por %p310, %p311
      %p313 = scmp.ne.s32.totalorder %s302, %s303
      %p314 = scmp.eq.s32.totalorder %s28, 0
      %p315 = por %p313, %p314
      %p316 = scmp.ne.s32.totalorder %s302, %s303
      %p317 = scmp.eq.s32.totalorder %s29, 1
      %p318 = por %p316, %p317
      %p320 = scmp.ne.s32.totalorder %s303, %s319
      %p321 = scmp.eq.s32.totalorder %s29, 0
      %p322 = por %p320, %p321
      %s323 = ssub.s32 %s23, %s30
      %p324 = scmp.eq.s32.totalorder %s323, 0
      %s326 = sadd.s32 %s325, 1
      %s327 = scalar_select %p324, %s325, %s326
      %p330 = pneg %p324
      %p331 = scmp.eq.s32.totalorder %s23, 1
      %p332 = por %p330, %p331
      %p333 = scmp.ne.s32.totalorder %s325, %s328
      %p334 = scmp.eq.s32.totalorder %s23, 0
      %p335 = por %p333, %p334
      %p336 = scmp.ne.s32.totalorder %s325, %s328
      %p337 = scmp.eq.s32.totalorder %s28, 1
      %p338 = por %p336, %p337
      %p339 = scmp.ne.s32.totalorder %s328, %s329
      %p340 = scmp.eq.s32.totalorder %s28, 0
      %p341 = por %p339, %p340
      %p342 = scmp.ne.s32.totalorder %s328, %s329
      %p343 = scmp.eq.s32.totalorder %s29, 1
      %p344 = por %p342, %p343
      %p346 = scmp.ne.s32.totalorder %s329, %s345
      %p347 = scmp.eq.s32.totalorder %s29, 0
      %p348 = por %p346, %p347
      %s349 = ssub.s32 %s23, %s30
      %p350 = scmp.eq.s32.totalorder %s349, 0
      %s352 = sadd.s32 %s351, 1
      %s353 = scalar_select %p350, %s351, %s352
      %p356 = pneg %p350
      %p357 = scmp.eq.s32.totalorder %s23, 1
      %p358 = por %p356, %p357
      %p359 = scmp.ne.s32.totalorder %s351, %s354
      %p360 = scmp.eq.s32.totalorder %s23, 0
      %p361 = por %p359, %p360
      %p362 = scmp.ne.s32.totalorder %s351, %s354
      %p363 = scmp.eq.s32.totalorder %s28, 1
      %p364 = por %p362, %p363
      %p365 = scmp.ne.s32.totalorder %s354, %s355
      %p366 = scmp.eq.s32.totalorder %s28, 0
      %p367 = por %p365, %p366
      %p368 = scmp.ne.s32.totalorder %s354, %s355
      %p369 = scmp.eq.s32.totalorder %s29, 1
      %p370 = por %p368, %p369
      %p372 = scmp.ne.s32.totalorder %s355, %s371
      %p373 = scmp.eq.s32.totalorder %s29, 0
      %p374 = por %p372, %p373
      %s375 = ssub.s32 %s23, %s30
      %p376 = scmp.eq.s32.totalorder %s375, 0
      %s378 = sadd.s32 %s377, 1
      %s379 = scalar_select %p376, %s377, %s378
      %p382 = pneg %p376
      %p383 = scmp.eq.s32.totalorder %s23, 1
      %p384 = por %p382, %p383
      %p385 = scmp.ne.s32.totalorder %s377, %s380
      %p386 = scmp.eq.s32.totalorder %s23, 0
      %p387 = por %p385, %p386
      %p388 = scmp.ne.s32.totalorder %s377, %s380
      %p389 = scmp.eq.s32.totalorder %s28, 1
      %p390 = por %p388, %p389
      %p391 = scmp.ne.s32.totalorder %s380, %s381
      %p392 = scmp.eq.s32.totalorder %s28, 0
      %p393 = por %p391, %p392
      %p394 = scmp.ne.s32.totalorder %s380, %s381
      %p395 = scmp.eq.s32.totalorder %s29, 1
      %p396 = por %p394, %p395
      %p398 = scmp.ne.s32.totalorder %s381, %s397
      %p399 = scmp.eq.s32.totalorder %s29, 0
      %p400 = por %p398, %p399
      %s401 = ssub.s32 %s23, %s30
      %p402 = scmp.eq.s32.totalorder %s401, 0
      %s404 = sadd.s32 %s403, 1
      %s405 = scalar_select %p402, %s403, %s404
      %p408 = pneg %p402
      %p409 = scmp.eq.s32.totalorder %s23, 1
      %p410 = por %p408, %p409
      %p411 = scmp.ne.s32.totalorder %s403, %s406
      %p412 = scmp.eq.s32.totalorder %s23, 0
      %p413 = por %p411, %p412
      %p414 = scmp.ne.s32.totalorder %s403, %s406
      %p415 = scmp.eq.s32.totalorder %s28, 1
      %p416 = por %p414, %p415
      %p417 = scmp.ne.s32.totalorder %s406, %s407
      %p418 = scmp.eq.s32.totalorder %s28, 0
      %p419 = por %p417, %p418
      %p420 = scmp.ne.s32.totalorder %s406, %s407
      %p421 = scmp.eq.s32.totalorder %s29, 1
      %p422 = por %p420, %p421
      %p424 = scmp.ne.s32.totalorder %s407, %s423
      %p425 = scmp.eq.s32.totalorder %s29, 0
      %p426 = por %p424, %p425
      %s428 = sadd.s32 %s427, 1
      %p431 = scmp.eq.s32.totalorder %s23, 1
      %p432 = scmp.ne.s32.totalorder %s427, %s429
      %p433 = scmp.eq.s32.totalorder %s23, 0
      %p434 = por %p432, %p433
      %p435 = scmp.ne.s32.totalorder %s427, %s429
      %p436 = scmp.eq.s32.totalorder %s28, 1
      %p437 = por %p435, %p436
      %p438 = scmp.ne.s32.totalorder %s429, %s430
      %p439 = scmp.eq.s32.totalorder %s28, 0
      %p440 = por %p438, %p439
      %p441 = scmp.ne.s32.totalorder %s429, %s430
      %p442 = scmp.eq.s32.totalorder %s29, 1
      %p443 = por %p441, %p442
      %p445 = scmp.ne.s32.totalorder %s430, %s444
      %p446 = scmp.eq.s32.totalorder %s29, 0
      %p447 = por %p445, %p446
      %p448 = scmp.le.s32.totalorder 1, %s23
      %p449 = scmp.lt.s32.totalorder %s23, 3
      %p450 = pnand %p448, %p449
      %p451 = pneg %p450
      // Predicated region
      $region9: #{sentence_transformer_forward.1} parent=5 // pred_check
        _
      $region10: #{sentence_transformer_forward.1} parent=5 // pred_check_branch
        %453 = sbr.rel (%p450) target = $region12
      $region11: #{sentence_transformer_forward.1} parent=5 // pred_region
        %s454 = ssub.s32 %s23, 1
        // Predicated region
        $region13: #{sentence_transformer_forward.1} parent=11 // pred_check
          %p455 = pneg %p44
        $region14: #{sentence_transformer_forward.1} parent=11 // pred_check_branch
          %457 = sbr.rel (%p455) target = $region16
        $region15: #{sentence_transformer_forward.1} parent=11 // pred_region
          _
        $region16: #{sentence_transformer_forward.1} parent=11 // pred_fallthru
          _
        // Predicated region
        $region17: #{sentence_transformer_forward.1} parent=11 // pred_check
          %p458 = pneg %p65
        $region18: #{sentence_transformer_forward.1} parent=11 // pred_check_branch
          %460 = sbr.rel (%p458) target = $region20
        $region19: #{sentence_transformer_forward.1} parent=11 // pred_region
          _
        $region20: #{sentence_transformer_forward.1} parent=11 // pred_fallthru
          _
        // Predicated region
        $region21: #{sentence_transformer_forward.1} parent=11 // pred_check
          %p461 = pneg %p86
        $region22: #{sentence_transformer_forward.1} parent=11 // pred_check_branch
          %463 = sbr.rel (%p461) target = $region24
        $region23: #{sentence_transformer_forward.1} parent=11 // pred_region
          _
        $region24: #{sentence_transformer_forward.1} parent=11 // pred_fallthru
          _
        // Predicated region
        $region25: #{sentence_transformer_forward.1} parent=11 // pred_check
          %p464 = pneg %p107
        $region26: #{sentence_transformer_forward.1} parent=11 // pred_check_branch
          %466 = sbr.rel (%p464) target = $region28
        $region27: #{sentence_transformer_forward.1} parent=11 // pred_region
          _
        $region28: #{sentence_transformer_forward.1} parent=11 // pred_fallthru
          _
      $region12: #{sentence_transformer_forward.1} parent=5 // pred_fallthru
        _
      %p467 = scmp.lt.s32.totalorder %s23, 2
      // Predicated region
      $region29: #{sentence_transformer_forward.1} parent=5 // pred_check
        %p468 = pneg %p467
      $region30: #{sentence_transformer_forward.1} parent=5 // pred_check_branch
        %470 = sbr.rel (%p468) target = $region32
      $region31: #{sentence_transformer_forward.1} parent=5 // pred_region
        // Predicated region
        $region33: #{sentence_transformer_forward.1} parent=31 // pred_check
          %p471 = pneg %p127
        $region34: #{sentence_transformer_forward.1} parent=31 // pred_check_branch
          %473 = sbr.rel (%p471) target = $region36
        $region35: #{sentence_transformer_forward.1} parent=31 // pred_region
          %p474 = scmp.lt.s32.totalorder %s23, 1
          %s475 = scalar_select %p474, %s23, 1
          %s476 = smul.addr %s475, 4
          %s477 = smul.addr %s476, 4
          %s478 = scalar_lea.vmem %s4, %s477
        $region36: #{sentence_transformer_forward.1} parent=31 // pred_fallthru
          _
        // Predicated region
        $region37: #{sentence_transformer_forward.1} parent=31 // pred_check
          %p479 = pneg %p153
        $region38: #{sentence_transformer_forward.1} parent=31 // pred_check_branch
          %481 = sbr.rel (%p479) target = $region40
        $region39: #{sentence_transformer_forward.1} parent=31 // pred_region
          %p482 = scmp.lt.s32.totalorder %s23, 1
          %s483 = scalar_select %p482, %s23, 1
          %s484 = scalar_lea.vmem %s5, %s483
        $region40: #{sentence_transformer_forward.1} parent=31 // pred_fallthru
          _
        // Predicated region
        $region41: #{sentence_transformer_forward.1} parent=31 // pred_check
          %p485 = pneg %p179
        $region42: #{sentence_transformer_forward.1} parent=31 // pred_check_branch
          %487 = sbr.rel (%p485) target = $region44
        $region43: #{sentence_transformer_forward.1} parent=31 // pred_region
          %p488 = scmp.lt.s32.totalorder %s23, 1
          %s489 = scalar_select %p488, %s23, 1
          %s490 = smul.addr %s489, 4
          %s491 = smul.addr %s490, 4
          %s492 = scalar_lea.vmem %s6, %s491
        $region44: #{sentence_transformer_forward.1} parent=31 // pred_fallthru
          _
        // Predicated region
        $region45: #{sentence_transformer_forward.1} parent=31 // pred_check
          %p493 = pneg %p205
        $region46: #{sentence_transformer_forward.1} parent=31 // pred_check_branch
          %495 = sbr.rel (%p493) target = $region48
        $region47: #{sentence_transformer_forward.1} parent=31 // pred_region
          %p496 = scmp.lt.s32.totalorder %s23, 1
          %s497 = scalar_select %p496, %s23, 1
          %s498 = scalar_lea.vmem %s7, %s497
        $region48: #{sentence_transformer_forward.1} parent=31 // pred_fallthru
          _
        // Predicated region
        $region49: #{sentence_transformer_forward.1} parent=31 // pred_check
          %p499 = pneg %p231
        $region50: #{sentence_transformer_forward.1} parent=31 // pred_check_branch
          %501 = sbr.rel (%p499) target = $region52
        $region51: #{sentence_transformer_forward.1} parent=31 // pred_region
          %p502 = scmp.lt.s32.totalorder %s23, 1
          %s503 = scalar_select %p502, %s23, 1
          %s504 = scalar_lea.vmem %s8, %s503
        $region52: #{sentence_transformer_forward.1} parent=31 // pred_fallthru
          _
        // Predicated region
        $region53: #{sentence_transformer_forward.1} parent=31 // pred_check
          %p505 = pneg %p257
        $region54: #{sentence_transformer_forward.1} parent=31 // pred_check_branch
          %507 = sbr.rel (%p505) target = $region56
        $region55: #{sentence_transformer_forward.1} parent=31 // pred_region
          %p508 = scmp.lt.s32.totalorder %s23, 1
          %s509 = scalar_select %p508, %s23, 1
          %s510 = scalar_lea.vmem %s9, %s509
        $region56: #{sentence_transformer_forward.1} parent=31 // pred_fallthru
          _
        // Predicated region
        $region57: #{sentence_transformer_forward.1} parent=31 // pred_check
          %p511 = pneg %p283
        $region58: #{sentence_transformer_forward.1} parent=31 // pred_check_branch
          %513 = sbr.rel (%p511) target = $region60
        $region59: #{sentence_transformer_forward.1} parent=31 // pred_region
          %p514 = scmp.lt.s32.totalorder %s23, 1
          %s515 = scalar_select %p514, %s23, 1
          %s516 = smul.addr %s515, 4
          %s517 = smul.addr %s516, 4
          %s518 = scalar_lea.vmem %s10, %s517
        $region60: #{sentence_transformer_forward.1} parent=31 // pred_fallthru
          _
        // Predicated region
        $region61: #{sentence_transformer_forward.1} parent=31 // pred_check
          %p519 = pneg %p309
        $region62: #{sentence_transformer_forward.1} parent=31 // pred_check_branch
          %521 = sbr.rel (%p519) target = $region64
        $region63: #{sentence_transformer_forward.1} parent=31 // pred_region
          %p522 = scmp.lt.s32.totalorder %s23, 1
          %s523 = scalar_select %p522, %s23, 1
          %s524 = scalar_lea.vmem %s11, %s523
        $region64: #{sentence_transformer_forward.1} parent=31 // pred_fallthru
          _
        // Predicated region
        $region65: #{sentence_transformer_forward.1} parent=31 // pred_check
          %p525 = pneg %p335
        $region66: #{sentence_transformer_forward.1} parent=31 // pred_check_branch
          %527 = sbr.rel (%p525) target = $region68
        $region67: #{sentence_transformer_forward.1} parent=31 // pred_region
          %p528 = scmp.lt.s32.totalorder %s23, 1
          %s529 = scalar_select %p528, %s23, 1
          %s530 = smul.addr %s529, 8
          %s531 = smul.addr %s530, 4
          %s532 = scalar_lea.vmem %s12, %s531
        $region68: #{sentence_transformer_forward.1} parent=31 // pred_fallthru
          _
        // Predicated region
        $region69: #{sentence_transformer_forward.1} parent=31 // pred_check
          %p533 = pneg %p361
        $region70: #{sentence_transformer_forward.1} parent=31 // pred_check_branch
          %535 = sbr.rel (%p533) target = $region72
        $region71: #{sentence_transformer_forward.1} parent=31 // pred_region
          %p536 = scmp.lt.s32.totalorder %s23, 1
          %s537 = scalar_select %p536, %s23, 1
          %s538 = scalar_lea.vmem %s13, %s537
        $region72: #{sentence_transformer_forward.1} parent=31 // pred_fallthru
          _
        // Predicated region
        $region73: #{sentence_transformer_forward.1} parent=31 // pred_check
          %p539 = pneg %p387
        $region74: #{sentence_transformer_forward.1} parent=31 // pred_check_branch
          %541 = sbr.rel (%p539) target = $region76
        $region75: #{sentence_transformer_forward.1} parent=31 // pred_region
          %p542 = scmp.lt.s32.totalorder %s23, 1
          %s543 = scalar_select %p542, %s23, 1
          %s544 = scalar_lea.vmem %s14, %s543
        $region76: #{sentence_transformer_forward.1} parent=31 // pred_fallthru
          _
        // Predicated region
        $region77: #{sentence_transformer_forward.1} parent=31 // pred_check
          %p545 = pneg %p413
        $region78: #{sentence_transformer_forward.1} parent=31 // pred_check_branch
          %547 = sbr.rel (%p545) target = $region80
        $region79: #{sentence_transformer_forward.1} parent=31 // pred_region
          %p548 = scmp.lt.s32.totalorder %s23, 1
          %s549 = scalar_select %p548, %s23, 1
          %s550 = scalar_lea.vmem %s15, %s549
        $region80: #{sentence_transformer_forward.1} parent=31 // pred_fallthru
          _
      $region32: #{sentence_transformer_forward.1} parent=5 // pred_fallthru
        _
      %p551 = scmp.le.s32.totalorder 1, %s23
      %p552 = scmp.lt.s32.totalorder %s23, 3
      %p553 = pnand %p551, %p552
      %p554 = pneg %p553
      // Predicated region
      $region81: #{sentence_transformer_forward.1} parent=5 // pred_check
        _
      $region82: #{sentence_transformer_forward.1} parent=5 // pred_check_branch
        %556 = sbr.rel (%p553) target = $region84
      $region83: #{sentence_transformer_forward.1} parent=5 // pred_region
        %s557 = ssub.s32 %s23, 1
        %p558 = pneg %p44
        %p559 = pneg %p41
        %p560 = pneg %p65
        %p561 = pneg %p62
        %p562 = pneg %p86
        %p563 = pneg %p83
        %p564 = pneg %p107
        %p565 = pneg %p104
        %p566 = scmp.lt.s32.totalorder %s28, 1
        %s567 = scalar_select %p566, %s28, 1
        %s568 = smul.addr %s567, 4
        %s569 = smul.addr %s568, 4
        %s570 = scalar_lea.vmem %s4, %s569
        %p571 = pneg %p133
        %p572 = pneg %p130
        %p573 = scmp.lt.s32.totalorder %s28, 1
        %s574 = scalar_select %p573, %s28, 1
        %s575 = scalar_lea.vmem %s5, %s574
        %p576 = pneg %p159
        %p577 = pneg %p156
        %p578 = scmp.lt.s32.totalorder %s28, 1
        %s579 = scalar_select %p578, %s28, 1
        %s580 = smul.addr %s579, 4
        %s581 = smul.addr %s580, 4
        %s582 = scalar_lea.vmem %s6, %s581
        %p583 = pneg %p185
        %p584 = pneg %p182
        %p585 = scmp.lt.s32.totalorder %s28, 1
        %s586 = scalar_select %p585, %s28, 1
        %s587 = scalar_lea.vmem %s7, %s586
        %p588 = pneg %p211
        %p589 = pneg %p208
        %p590 = scmp.lt.s32.totalorder %s28, 1
        %s591 = scalar_select %p590, %s28, 1
        %s592 = scalar_lea.vmem %s8, %s591
        %p593 = pneg %p237
        %p594 = pneg %p234
        %p595 = scmp.lt.s32.totalorder %s28, 1
        %s596 = scalar_select %p595, %s28, 1
        %s597 = scalar_lea.vmem %s9, %s596
        %p598 = pneg %p263
        %p599 = pneg %p260
        %p600 = scmp.lt.s32.totalorder %s28, 1
        %s601 = scalar_select %p600, %s28, 1
        %s602 = smul.addr %s601, 4
        %s603 = smul.addr %s602, 4
        %s604 = scalar_lea.vmem %s10, %s603
        %p605 = pneg %p289
        %p606 = pneg %p286
        %p607 = scmp.lt.s32.totalorder %s28, 1
        %s608 = scalar_select %p607, %s28, 1
        %s609 = scalar_lea.vmem %s11, %s608
        %p610 = pneg %p315
        %p611 = pneg %p312
        %p612 = scmp.lt.s32.totalorder %s28, 1
        %s613 = scalar_select %p612, %s28, 1
        %s614 = smul.addr %s613, 8
        %s615 = smul.addr %s614, 4
        %s616 = scalar_lea.vmem %s12, %s615
        %p617 = pneg %p341
        %p618 = pneg %p338
        %p619 = scmp.lt.s32.totalorder %s28, 1
        %s620 = scalar_select %p619, %s28, 1
        %s621 = scalar_lea.vmem %s13, %s620
        %p622 = pneg %p367
        %p623 = pneg %p364
        %p624 = scmp.lt.s32.totalorder %s28, 1
        %s625 = scalar_select %p624, %s28, 1
        %s626 = scalar_lea.vmem %s14, %s625
        %p627 = pneg %p393
        %p628 = pneg %p390
        %p629 = scmp.lt.s32.totalorder %s28, 1
        %s630 = scalar_select %p629, %s28, 1
        %s631 = scalar_lea.vmem %s15, %s630
        %p632 = pneg %p419
        %p633 = pneg %p416
        %p634 = pneg %p440
        %p635 = pneg %p437
        %p636 = scmp.lt.s32.totalorder %s28, 1
        %s637 = scalar_select %p636, %s28, 1
        %s638 = smul.addr %s637, 4
        %s639 = smul.addr %s638, 4
        %s640 = scalar_lea.vmem %s4, %s639
        %p641 = scmp.lt.s32.totalorder %s28, 1
        %s642 = scalar_select %p641, %s28, 1
        %s643 = scalar_lea.vmem %s5, %s642
        %p644 = scmp.lt.s32.totalorder %s28, 1
        %s645 = scalar_select %p644, %s28, 1
        %s646 = smul.addr %s645, 4
        %s647 = smul.addr %s646, 4
        %s648 = scalar_lea.vmem %s6, %s647
        %p649 = scmp.lt.s32.totalorder %s28, 1
        %s650 = scalar_select %p649, %s28, 1
        %s651 = scalar_lea.vmem %s7, %s650
        %p652 = scmp.lt.s32.totalorder %s28, 1
        %s653 = scalar_select %p652, %s28, 1
        %s654 = scalar_lea.vmem %s8, %s653
        %p655 = scmp.lt.s32.totalorder %s28, 1
        %s656 = scalar_select %p655, %s28, 1
        %s657 = scalar_lea.vmem %s9, %s656
        %p658 = scmp.lt.s32.totalorder %s28, 1
        %s659 = scalar_select %p658, %s28, 1
        %s660 = smul.addr %s659, 4
        %s661 = smul.addr %s660, 4
        %s662 = scalar_lea.vmem %s10, %s661
        %p663 = scmp.lt.s32.totalorder %s28, 1
        %s664 = scalar_select %p663, %s28, 1
        %s665 = scalar_lea.vmem %s11, %s664
        %p666 = scmp.lt.s32.totalorder %s28, 1
        %s667 = scalar_select %p666, %s28, 1
        %s668 = smul.addr %s667, 8
        %s669 = smul.addr %s668, 4
        %s670 = scalar_lea.vmem %s12, %s669
        %p671 = scmp.lt.s32.totalorder %s28, 1
        %s672 = scalar_select %p671, %s28, 1
        %s673 = scalar_lea.vmem %s13, %s672
        %p674 = scmp.lt.s32.totalorder %s28, 1
        %s675 = scalar_select %p674, %s28, 1
        %s676 = scalar_lea.vmem %s14, %s675
        %p677 = scmp.lt.s32.totalorder %s28, 1
        %s678 = scalar_select %p677, %s28, 1
        %s679 = scalar_lea.vmem %s15, %s678
        %p681 = scmp.eq.s32.totalorder %s28, 0
        // Predicated region
        $region85: #{sentence_transformer_forward.1} parent=83 // pred_check
          %p682 = pneg %p681
        $region86: #{sentence_transformer_forward.1} parent=83 // pred_check_branch
          %684 = sbr.rel (%p682) target = $region88
        $region87: #{sentence_transformer_forward.1} parent=83 // pred_region
          %v685 = vld [vmem:[%s0] sm:$0xff]
          %v686 = vld [vmem:[%s0 + $0x8] sm:$0xff]
          %v687 = vld [vmem:[%s2] sm:$0x1]
          %v688 = vld [vmem:[%s3] sm:$0x1]
          %vm689 = vcmask 261120
          %v690 = vsel %vm689, %v685, 0.0
          %691 = vadd.xlane.f32.xlu0 %v690
          %v692 = vpop.xlane.xlu0 %691
          %v693 = vsel %vm689, %v686, 0.0
          %694 = vadd.xlane.f32.xlu0 %v693
          %v695 = vpop.xlane.xlu0 %694
          %v696 = vrcp.pop 32.0
          %v697 = vmul.f32 %v692, %v696
          %v698 = vmul.f32 %v695, %v696
          %v699 = vmul.f32 %v685, %v685
          %v700 = vmul.f32 %v686, %v686
          %v701 = vsel %vm689, %v699, 0.0
          %702 = vadd.xlane.f32.xlu0 %v701
          %v703 = vpop.xlane.xlu0 %702
          %v704 = vsel %vm689, %v700, 0.0
          %705 = vadd.xlane.f32.xlu0 %v704
          %v706 = vpop.xlane.xlu0 %705
          %v707 = vmul.f32 %v703, %v696
          %v708 = vmul.f32 %v706, %v696
          %v709 = vmul.f32 %v697, %v697
          %v710 = vmul.f32 %v698, %v698
          %v711 = vsub.f32 %v707, %v709
          %v712 = vsub.f32 %v708, %v710
          %v713 = vsub.f32 %v685, %v697
          %v714 = vsub.f32 %v686, %v698
          %v715 = vadd.f32 %v711, 1e-12
          %v716 = vadd.f32 %v712, 1e-12
          %v717 = vrsqrt.pop %v715
          %v718 = vrsqrt.pop %v716
          %v719 = vmul.f32 %v713, %v717
          %v720 = vmul.f32 %v714, %v718
          %v722 = vlaneseq
          %v723 = vshrl.u32 %v722, 7
          %v724 = vsub.s32 0, %v723
          %v725 = vrot.slane %v687, %v724
          %v727 = vmul.f32 %v719, %v725
          %v728 = vmul.f32 %v720, %v725
          %v730 = vlaneseq
          %v731 = vshrl.u32 %v730, 7
          %v732 = vsub.s32 0, %v731
          %v733 = vrot.slane %v688, %v732
          %v735 = vadd.f32 %v727, %v733
          %v736 = vadd.f32 %v728, %v733
          %737 = vst.msk [vmem:[#allocation2] sm:$0xff] %vm689, %v735
          %738 = vst.msk [vmem:[#allocation2 + $0x8] sm:$0xff] %vm689, %v736
        $region88: #{sentence_transformer_forward.1} parent=83 // pred_fallthru
          _
        %v739 = vld [vmem:[#allocation2] sm:$0xff]
        %v740 = vld [vmem:[#allocation2 + $0x8] sm:$0xff]
        %v741 = vpack.c.bf16 %v740, %v739
        %v742 = vld [vmem:[%s640] sm:$0xf]
        %v743 = vld [vmem:[%s640 + $0x4] sm:$0xf]
        %v744 = vld [vmem:[%s640 + $0x8] sm:$0xf]
        %v745 = vld [vmem:[%s640 + $0xc] sm:$0xf]
        %v746 = vld [vmem:[%s643] sm:$0x1]
        %v748 = vlaneseq
        %v749 = vshrl.u32 %v748, 7
        %v750 = vsub.s32 0, %v749
        %v751 = vrot.slane %v746, %v750
        %v757 = vunpack.c.l.b16 %v742
        %v758 = vunpack.c.l.b16 %v743
        %v759 = vunpack.c.l.b16 %v744
        %v760 = vunpack.c.l.b16 %v745
        %v761 = vpack.c.b16 %v758, %v757
        %v762 = vpack.c.b16 %v760, %v759
        %vm765 = vcmask 261120
        %v767 = vsel %vm765, %v741, 0
        %769 = vmatprep.subr.bf16.mxu0 0
        %770 = vmatpush1.bf16.msra.mxu0 0
        %771 = vmatprep.subr.bf16.mxu0 0
        %772 = vmatpush1.bf16.msra.mxu0 0
        %773 = vmatprep.subr.bf16.mxu0 0
        %774 = vmatpush1.bf16.msra.mxu0 0
        %775 = vmatprep.subr.bf16.mxu0 0
        %776 = vmatpush1.bf16.msra.mxu0 0
        %777 = vmatprep.subr.bf16.mxu0 0
        %778 = vmatpush1.bf16.msra.mxu0 0
        %779 = vmatprep.subr.bf16.mxu0 0
        %780 = vmatpush1.bf16.msra.mxu0 0
        %781 = vmatprep.subr.bf16.mxu0 0
        %782 = vmatpush1.bf16.msra.mxu0 %v762
        %783 = vmatprep.subr.bf16.mxu0 0
        %784 = vmatpush1.bf16.msra.mxu0 %v761
        %785 = vmatprep.subr.bf16.mxu0 0
        %786 = vmatpush2.bf16.msra.mxu0 0
        %787 = vmatprep.subr.bf16.mxu0 0
        %788 = vmatpush2.bf16.msra.mxu0 0
        %789 = vmatprep.subr.bf16.mxu0 0
        %790 = vmatpush2.bf16.msra.mxu0 0
        %791 = vmatprep.subr.bf16.mxu0 0
        %792 = vmatpush2.bf16.msra.mxu0 0
        %793 = vmatprep.subr.bf16.mxu0 0
        %794 = vmatpush2.bf16.msra.mxu0 0
        %795 = vmatprep.subr.bf16.mxu0 0
        %796 = vmatpush2.bf16.msra.mxu0 0
        %797 = vmatprep.subr.bf16.mxu0 0
        %798 = vmatpush2.bf16.msra.mxu0 0
        %799 = vmatprep.subr.bf16.mxu0 0
        %800 = vmatpush2.bf16.msra.mxu0 0
        %801 = vmatprep.mubr.bf16.mxu0 0
        %802 = vmatmul.mubr.bf16.gmra.mxu0 %v767
        %v803 = vpop.f32.mrf.mxu0
        %v804 = vadd.f32 %v751, %v803
        %v805 = vpop.f32.mrf.mxu0
        %v806 = vpop.f32.mrf.mxu0
        %v807 = vadd.f32 %v751, %v806
        %v808 = vpop.f32.mrf.mxu0
        %809 = vdwg.mxu0
        %v810 = vld [vmem:[%s1] sm:$0x1]
        %v811 = vld [vmem:[%s1 + $0x1] sm:$0x1]
        %v814 = vlaneseq
        %v815 = vshrl.u32 %v814, 7
        %v816 = vsub.s32 0, %v815
        %v817 = vrot.slane %v810, %v816
        %v818 = vlaneseq
        %v819 = vshrl.u32 %v818, 7
        %v820 = vsub.s32 0, %v819
        %v821 = vrot.slane %v811, %v820
        %v824 = vpack.c.bf16 %v804, %v804
        %v825 = vpack.c.bf16 %v807, %v807
        %827 = vrot.lane.b32.xlu0 %v824, 96
        %v828 = vpop.permute.xlu0 %827
        %vm829 = vcmask 64512
        %v831 = vsel %vm829, %v824, 0
        %v834 = vsel %vm829, %v828, 0
        %836 = vmatprep.subr.bf16.mxu0 0
        %837 = vmatpush1.bf16.xpose.msra.mxu0 0
        %838 = vmatprep.subr.bf16.mxu0 0
        %839 = vmatpush1.bf16.xpose.msra.mxu0 0
        %840 = vmatprep.subr.bf16.mxu0 0
        %841 = vmatpush1.bf16.xpose.msra.mxu0 0
        %842 = vmatprep.subr.bf16.mxu0 0
        %843 = vmatpush1.bf16.xpose.msra.mxu0 0
        %844 = vmatprep.subr.bf16.mxu0 0
        %845 = vmatpush1.bf16.xpose.msra.mxu0 0
        %846 = vmatprep.subr.bf16.mxu0 0
        %847 = vmatpush1.bf16.xpose.msra.mxu0 0
        %848 = vmatprep.subr.bf16.mxu0 0
        %849 = vmatpush1.bf16.xpose.msra.mxu0 0
        %850 = vmatprep.subr.bf16.mxu0 0
        %851 = vmatpush1.bf16.xpose.msra.mxu0 %v834
        %852 = vmatprep.subr.bf16.mxu0 0
        %853 = vmatpush2.bf16.xpose.msra.mxu0 0
        %854 = vmatprep.subr.bf16.mxu0 0
        %855 = vmatpush2.bf16.xpose.msra.mxu0 0
        %856 = vmatprep.subr.bf16.mxu0 0
        %857 = vmatpush2.bf16.xpose.msra.mxu0 0
        %858 = vmatprep.subr.bf16.mxu0 0
        %859 = vmatpush2.bf16.xpose.msra.mxu0 0
        %860 = vmatprep.subr.bf16.mxu0 0
        %861 = vmatpush2.bf16.xpose.msra.mxu0 0
        %862 = vmatprep.subr.bf16.mxu0 0
        %863 = vmatpush2.bf16.xpose.msra.mxu0 0
        %864 = vmatprep.subr.bf16.mxu0 0
        %865 = vmatpush2.bf16.xpose.msra.mxu0 0
        %866 = vmatprep.subr.bf16.mxu0 0
        %867 = vmatpush2.bf16.xpose.msra.mxu0 0
        %868 = vmatprep.mubr.bf16.mxu0 0
        %869 = vmatmul.mubr.bf16.gmra.mxu0 %v831
        %v870 = vpop.f32.mrf.mxu0
        %v871 = vadd.f32 %v817, %v870
        %v872 = vpop.f32.mrf.mxu0
        %v873 = vpop.f32.mrf.mxu0
        %v874 = vpop.f32.mrf.mxu0
        %875 = vdwg.mxu0
        %877 = vrot.lane.b32.xlu0 %v825, 96
        %v878 = vpop.permute.xlu0 %877
        %v880 = vsel %vm829, %v825, 0
        %v883 = vsel %vm829, %v878, 0
        %885 = vmatprep.subr.bf16.mxu0 0
        %886 = vmatpush1.bf16.xpose.msra.mxu0 0
        %887 = vmatprep.subr.bf16.mxu0 0
        %888 = vmatpush1.bf16.xpose.msra.mxu0 0
        %889 = vmatprep.subr.bf16.mxu0 0
        %890 = vmatpush1.bf16.xpose.msra.mxu0 0
        %891 = vmatprep.subr.bf16.mxu0 0
        %892 = vmatpush1.bf16.xpose.msra.mxu0 0
        %893 = vmatprep.subr.bf16.mxu0 0
        %894 = vmatpush1.bf16.xpose.msra.mxu0 0
        %895 = vmatprep.subr.bf16.mxu0 0
        %896 = vmatpush1.bf16.xpose.msra.mxu0 0
        %897 = vmatprep.subr.bf16.mxu0 0
        %898 = vmatpush1.bf16.xpose.msra.mxu0 0
        %899 = vmatprep.subr.bf16.mxu0 0
        %900 = vmatpush1.bf16.xpose.msra.mxu0 %v883
        %901 = vmatprep.subr.bf16.mxu0 0
        %902 = vmatpush2.bf16.xpose.msra.mxu0 0
        %903 = vmatprep.subr.bf16.mxu0 0
        %904 = vmatpush2.bf16.xpose.msra.mxu0 0
        %905 = vmatprep.subr.bf16.mxu0 0
        %906 = vmatpush2.bf16.xpose.msra.mxu0 0
        %907 = vmatprep.subr.bf16.mxu0 0
        %908 = vmatpush2.bf16.xpose.msra.mxu0 0
        %909 = vmatprep.subr.bf16.mxu0 0
        %910 = vmatpush2.bf16.xpose.msra.mxu0 0
        %911 = vmatprep.subr.bf16.mxu0 0
        %912 = vmatpush2.bf16.xpose.msra.mxu0 0
        %913 = vmatprep.subr.bf16.mxu0 0
        %914 = vmatpush2.bf16.xpose.msra.mxu0 0
        %915 = vmatprep.subr.bf16.mxu0 0
        %916 = vmatpush2.bf16.xpose.msra.mxu0 0
        %917 = vmatprep.mubr.bf16.mxu0 0
        %918 = vmatmul.mubr.bf16.gmra.mxu0 %v880
        %v919 = vpop.f32.mrf.mxu0
        %v920 = vadd.f32 %v821, %v919
        %v921 = vpop.f32.mrf.mxu0
        %v922 = vpop.f32.mrf.mxu0
        %v923 = vpop.f32.mrf.mxu0
        %924 = vdwg.mxu0
        %v925 = vsel %vm829, %v871, -inf
        %926 = vmax.xlane.f32.xlu0 %v925
        %v927 = vpop.xlane.xlu0 %926
        %v928 = vsel %vm829, %v920, -inf
        %929 = vmax.xlane.f32.xlu0 %v928
        %v930 = vpop.xlane.xlu0 %929
        %v931 = vsub.f32 %v871, %v927
        %v932 = vsub.f32 %v920, %v930
        %v933 = vmul.f32 %v931, 1.442695
        %v934 = vpow.pop %v933
        %v935 = vmul.f32 %v932, 1.442695
        %v936 = vpow.pop %v935
        %v937 = vsel %vm829, %v934, 0.0
        %938 = vadd.xlane.f32.xlu0 %v937
        %v939 = vpop.xlane.xlu0 %938
        %v940 = vsel %vm829, %v936, 0.0
        %941 = vadd.xlane.f32.xlu0 %v940
        %v942 = vpop.xlane.xlu0 %941
        %v943 = vrcp.pop %v939
        %v944 = vrcp.pop %v942
        %v945 = vmul.f32 %v934, %v943
        %v946 = vmul.f32 %v936, %v944
        %v947 = vpack.c.bf16 %v945, %v945
        %v948 = vpack.c.bf16 %v946, %v946
        %949 = vrot.lane.b32.xlu0 %v824, 64
        %v950 = vpop.permute.xlu0 %949
        %v952 = vsel %vm829, %v947, 0
        %vm954 = vcmask 1043456
        %v956 = vsel %vm954, %v950, 0
        %958 = vmatprep.subr.bf16.mxu0 0
        %959 = vmatpush1.bf16.msra.mxu0 0
        %960 = vmatprep.subr.bf16.mxu0 0
        %961 = vmatpush1.bf16.msra.mxu0 0
        %962 = vmatprep.subr.bf16.mxu0 0
        %963 = vmatpush1.bf16.msra.mxu0 0
        %964 = vmatprep.subr.bf16.mxu0 0
        %965 = vmatpush1.bf16.msra.mxu0 0
        %966 = vmatprep.subr.bf16.mxu0 0
        %967 = vmatpush1.bf16.msra.mxu0 0
        %968 = vmatprep.subr.bf16.mxu0 0
        %969 = vmatpush1.bf16.msra.mxu0 0
        %970 = vmatprep.subr.bf16.mxu0 0
        %971 = vmatpush1.bf16.msra.mxu0 0
        %972 = vmatprep.subr.bf16.mxu0 0
        %973 = vmatpush1.bf16.msra.mxu0 %v956
        %974 = vmatprep.subr.bf16.mxu0 0
        %975 = vmatpush2.bf16.msra.mxu0 0
        %976 = vmatprep.subr.bf16.mxu0 0
        %977 = vmatpush2.bf16.msra.mxu0 0
        %978 = vmatprep.subr.bf16.mxu0 0
        %979 = vmatpush2.bf16.msra.mxu0 0
        %980 = vmatprep.subr.bf16.mxu0 0
        %981 = vmatpush2.bf16.msra.mxu0 0
        %982 = vmatprep.subr.bf16.mxu0 0
        %983 = vmatpush2.bf16.msra.mxu0 0
        %984 = vmatprep.subr.bf16.mxu0 0
        %985 = vmatpush2.bf16.msra.mxu0 0
        %986 = vmatprep.subr.bf16.mxu0 0
        %987 = vmatpush2.bf16.msra.mxu0 0
        %988 = vmatprep.subr.bf16.mxu0 0
        %989 = vmatpush2.bf16.msra.mxu0 0
        %990 = vmatprep.mubr.bf16.mxu0 0
        %991 = vmatmul.mubr.bf16.gmra.mxu0 %v952
        %v992 = vpop.f32.mrf.mxu0
        %v993 = vadd.f32 0.0, %v992
        %v994 = vpop.f32.mrf.mxu0
        %v995 = vpop.f32.mrf.mxu0
        %v996 = vpop.f32.mrf.mxu0
        %997 = vdwg.mxu0
        %998 = vrot.lane.b32.xlu0 %v825, 64
        %v999 = vpop.permute.xlu0 %998
        %v1001 = vsel %vm829, %v948, 0
        %v1004 = vsel %vm954, %v999, 0
        %1006 = vmatprep.subr.bf16.mxu0 0
        %1007 = vmatpush1.bf16.msra.mxu0 0
        %1008 = vmatprep.subr.bf16.mxu0 0
        %1009 = vmatpush1.bf16.msra.mxu0 0
        %1010 = vmatprep.subr.bf16.mxu0 0
        %1011 = vmatpush1.bf16.msra.mxu0 0
        %1012 = vmatprep.subr.bf16.mxu0 0
        %1013 = vmatpush1.bf16.msra.mxu0 0
        %1014 = vmatprep.subr.bf16.mxu0 0
        %1015 = vmatpush1.bf16.msra.mxu0 0
        %1016 = vmatprep.subr.bf16.mxu0 0
        %1017 = vmatpush1.bf16.msra.mxu0 0
        %1018 = vmatprep.subr.bf16.mxu0 0
        %1019 = vmatpush1.bf16.msra.mxu0 0
        %1020 = vmatprep.subr.bf16.mxu0 0
        %1021 = vmatpush1.bf16.msra.mxu0 %v1004
        %1022 = vmatprep.subr.bf16.mxu0 0
        %1023 = vmatpush2.bf16.msra.mxu0 0
        %1024 = vmatprep.subr.bf16.mxu0 0
        %1025 = vmatpush2.bf16.msra.mxu0 0
        %1026 = vmatprep.subr.bf16.mxu0 0
        %1027 = vmatpush2.bf16.msra.mxu0 0
        %1028 = vmatprep.subr.bf16.mxu0 0
        %1029 = vmatpush2.bf16.msra.mxu0 0
        %1030 = vmatprep.subr.bf16.mxu0 0
        %1031 = vmatpush2.bf16.msra.mxu0 0
        %1032 = vmatprep.subr.bf16.mxu0 0
        %1033 = vmatpush2.bf16.msra.mxu0 0
        %1034 = vmatprep.subr.bf16.mxu0 0
        %1035 = vmatpush2.bf16.msra.mxu0 0
        %1036 = vmatprep.subr.bf16.mxu0 0
        %1037 = vmatpush2.bf16.msra.mxu0 0
        %1038 = vmatprep.mubr.bf16.mxu0 0
        %1039 = vmatmul.mubr.bf16.gmra.mxu0 %v1001
        %v1040 = vpop.f32.mrf.mxu0
        %v1041 = vadd.f32 0.0, %v1040
        %v1042 = vpop.f32.mrf.mxu0
        %v1043 = vpop.f32.mrf.mxu0
        %v1044 = vpop.f32.mrf.mxu0
        %1045 = vdwg.mxu0
        %1046 = vrot.lane.b32.xlu0 %v824, 120
        %v1047 = vpop.permute.xlu0 %1046
        %1048 = vrot.lane.b32.xlu0 %v824, 88
        %v1049 = vpop.permute.xlu0 %1048
        %v1051 = vsel %vm829, %v1047, 0
        %v1054 = vsel %vm829, %v1049, 0
        %1056 = vmatprep.subr.bf16.mxu0 0
        %1057 = vmatpush1.bf16.xpose.msra.mxu0 0
        %1058 = vmatprep.subr.bf16.mxu0 0
        %1059 = vmatpush1.bf16.xpose.msra.mxu0 0
        %1060 = vmatprep.subr.bf16.mxu0 0
        %1061 = vmatpush1.bf16.xpose.msra.mxu0 0
        %1062 = vmatprep.subr.bf16.mxu0 0
        %1063 = vmatpush1.bf16.xpose.msra.mxu0 0
        %1064 = vmatprep.subr.bf16.mxu0 0
        %1065 = vmatpush1.bf16.xpose.msra.mxu0 0
        %1066 = vmatprep.subr.bf16.mxu0 0
        %1067 = vmatpush1.bf16.xpose.msra.mxu0 0
        %1068 = vmatprep.subr.bf16.mxu0 0
        %1069 = vmatpush1.bf16.xpose.msra.mxu0 0
        %1070 = vmatprep.subr.bf16.mxu0 0
        %1071 = vmatpush1.bf16.xpose.msra.mxu0 %v1054
        %1072 = vmatprep.subr.bf16.mxu0 0
        %1073 = vmatpush2.bf16.xpose.msra.mxu0 0
        %1074 = vmatprep.subr.bf16.mxu0 0
        %1075 = vmatpush2.bf16.xpose.msra.mxu0 0
        %1076 = vmatprep.subr.bf16.mxu0 0
        %1077 = vmatpush2.bf16.xpose.msra.mxu0 0
        %1078 = vmatprep.subr.bf16.mxu0 0
        %1079 = vmatpush2.bf16.xpose.msra.mxu0 0
        %1080 = vmatprep.subr.bf16.mxu0 0
        %1081 = vmatpush2.bf16.xpose.msra.mxu0 0
        %1082 = vmatprep.subr.bf16.mxu0 0
        %1083 = vmatpush2.bf16.xpose.msra.mxu0 0
        %1084 = vmatprep.subr.bf16.mxu0 0
        %1085 = vmatpush2.bf16.xpose.msra.mxu0 0
        %1086 = vmatprep.subr.bf16.mxu0 0
        %1087 = vmatpush2.bf16.xpose.msra.mxu0 0
        %1088 = vmatprep.mubr.bf16.mxu0 0
        %1089 = vmatmul.mubr.bf16.gmra.mxu0 %v1051
        %v1090 = vpop.f32.mrf.mxu0
        %v1091 = vadd.f32 %v817, %v1090
        %v1092 = vpop.f32.mrf.mxu0
        %v1093 = vpop.f32.mrf.mxu0
        %v1094 = vpop.f32.mrf.mxu0
        %1095 = vdwg.mxu0
        %1096 = vrot.lane.b32.xlu0 %v825, 120
        %v1097 = vpop.permute.xlu0 %1096
        %1098 = vrot.lane.b32.xlu0 %v825, 88
        %v1099 = vpop.permute.xlu0 %1098
        %v1101 = vsel %vm829, %v1097, 0
        %v1104 = vsel %vm829, %v1099, 0
        %1106 = vmatprep.subr.bf16.mxu0 0
        %1107 = vmatpush1.bf16.xpose.msra.mxu0 0
        %1108 = vmatprep.subr.bf16.mxu0 0
        %1109 = vmatpush1.bf16.xpose.msra.mxu0 0
        %1110 = vmatprep.subr.bf16.mxu0 0
        %1111 = vmatpush1.bf16.xpose.msra.mxu0 0
        %1112 = vmatprep.subr.bf16.mxu0 0
        %1113 = vmatpush1.bf16.xpose.msra.mxu0 0
        %1114 = vmatprep.subr.bf16.mxu0 0
        %1115 = vmatpush1.bf16.xpose.msra.mxu0 0
        %1116 = vmatprep.subr.bf16.mxu0 0
        %1117 = vmatpush1.bf16.xpose.msra.mxu0 0
        %1118 = vmatprep.subr.bf16.mxu0 0
        %1119 = vmatpush1.bf16.xpose.msra.mxu0 0
        %1120 = vmatprep.subr.bf16.mxu0 0
        %1121 = vmatpush1.bf16.xpose.msra.mxu0 %v1104
        %1122 = vmatprep.subr.bf16.mxu0 0
        %1123 = vmatpush2.bf16.xpose.msra.mxu0 0
        %1124 = vmatprep.subr.bf16.mxu0 0
        %1125 = vmatpush2.bf16.xpose.msra.mxu0 0
        %1126 = vmatprep.subr.bf16.mxu0 0
        %1127 = vmatpush2.bf16.xpose.msra.mxu0 0
        %1128 = vmatprep.subr.bf16.mxu0 0
        %1129 = vmatpush2.bf16.xpose.msra.mxu0 0
        %1130 = vmatprep.subr.bf16.mxu0 0
        %1131 = vmatpush2.bf16.xpose.msra.mxu0 0
        %1132 = vmatprep.subr.bf16.mxu0 0
        %1133 = vmatpush2.bf16.xpose.msra.mxu0 0
        %1134 = vmatprep.subr.bf16.mxu0 0
        %1135 = vmatpush2.bf16.xpose.msra.mxu0 0
        %1136 = vmatprep.subr.bf16.mxu0 0
        %1137 = vmatpush2.bf16.xpose.msra.mxu0 0
        %1138 = vmatprep.mubr.bf16.mxu0 0
        %1139 = vmatmul.mubr.bf16.gmra.mxu0 %v1101
        %v1140 = vpop.f32.mrf.mxu0
        %v1141 = vadd.f32 %v821, %v1140
        %v1142 = vpop.f32.mrf.mxu0
        %v1143 = vpop.f32.mrf.mxu0
        %v1144 = vpop.f32.mrf.mxu0
        %1145 = vdwg.mxu0
        %v1146 = vsel %vm829, %v1091, -inf
        %1147 = vmax.xlane.f32.xlu0 %v1146
        %v1148 = vpop.xlane.xlu0 %1147
        %v1149 = vsel %vm829, %v1141, -inf
        %1150 = vmax.xlane.f32.xlu0 %v1149
        %v1151 = vpop.xlane.xlu0 %1150
        %v1152 = vsub.f32 %v1091, %v1148
        %v1153 = vsub.f32 %v1141, %v1151
        %v1154 = vmul.f32 %v1152, 1.442695
        %v1155 = vpow.pop %v1154
        %v1156 = vmul.f32 %v1153, 1.442695
        %v1157 = vpow.pop %v1156
        %v1158 = vsel %vm829, %v1155, 0.0
        %1159 = vadd.xlane.f32.xlu0 %v1158
        %v1160 = vpop.xlane.xlu0 %1159
        %v1161 = vsel %vm829, %v1157, 0.0
        %1162 = vadd.xlane.f32.xlu0 %v1161
        %v1163 = vpop.xlane.xlu0 %1162
        %v1164 = vrcp.pop %v1160
        %v1165 = vrcp.pop %v1163
        %v1166 = vmul.f32 %v1155, %v1164
        %v1167 = vmul.f32 %v1157, %v1165
        %v1168 = vpack.c.bf16 %v1166, %v1166
        %v1169 = vpack.c.bf16 %v1167, %v1167
        %1170 = vrot.lane.b32.xlu0 %v824, 56
        %v1171 = vpop.permute.xlu0 %1170
        %v1173 = vsel %vm829, %v1168, 0
        %v1176 = vsel %vm954, %v1171, 0
        %1178 = vmatprep.subr.bf16.mxu0 0
        %1179 = vmatpush1.bf16.msra.mxu0 0
        %1180 = vmatprep.subr.bf16.mxu0 0
        %1181 = vmatpush1.bf16.msra.mxu0 0
        %1182 = vmatprep.subr.bf16.mxu0 0
        %1183 = vmatpush1.bf16.msra.mxu0 0
        %1184 = vmatprep.subr.bf16.mxu0 0
        %1185 = vmatpush1.bf16.msra.mxu0 0
        %1186 = vmatprep.subr.bf16.mxu0 0
        %1187 = vmatpush1.bf16.msra.mxu0 0
        %1188 = vmatprep.subr.bf16.mxu0 0
        %1189 = vmatpush1.bf16.msra.mxu0 0
        %1190 = vmatprep.subr.bf16.mxu0 0
        %1191 = vmatpush1.bf16.msra.mxu0 0
        %1192 = vmatprep.subr.bf16.mxu0 0
        %1193 = vmatpush1.bf16.msra.mxu0 %v1176
        %1194 = vmatprep.subr.bf16.mxu0 0
        %1195 = vmatpush2.bf16.msra.mxu0 0
        %1196 = vmatprep.subr.bf16.mxu0 0
        %1197 = vmatpush2.bf16.msra.mxu0 0
        %1198 = vmatprep.subr.bf16.mxu0 0
        %1199 = vmatpush2.bf16.msra.mxu0 0
        %1200 = vmatprep.subr.bf16.mxu0 0
        %1201 = vmatpush2.bf16.msra.mxu0 0
        %1202 = vmatprep.subr.bf16.mxu0 0
        %1203 = vmatpush2.bf16.msra.mxu0 0
        %1204 = vmatprep.subr.bf16.mxu0 0
        %1205 = vmatpush2.bf16.msra.mxu0 0
        %1206 = vmatprep.subr.bf16.mxu0 0
        %1207 = vmatpush2.bf16.msra.mxu0 0
        %1208 = vmatprep.subr.bf16.mxu0 0
        %1209 = vmatpush2.bf16.msra.mxu0 0
        %1210 = vmatprep.mubr.bf16.mxu0 0
        %1211 = vmatmul.mubr.bf16.gmra.mxu0 %v1173
        %v1212 = vpop.f32.mrf.mxu0
        %v1213 = vadd.f32 0.0, %v1212
        %v1214 = vpop.f32.mrf.mxu0
        %v1215 = vpop.f32.mrf.mxu0
        %v1216 = vpop.f32.mrf.mxu0
        %1217 = vdwg.mxu0
        %1218 = vrot.lane.b32.xlu0 %v825, 56
        %v1219 = vpop.permute.xlu0 %1218
        %v1221 = vsel %vm829, %v1169, 0
        %v1224 = vsel %vm954, %v1219, 0
        %1226 = vmatprep.subr.bf16.mxu0 0
        %1227 = vmatpush1.bf16.msra.mxu0 0
        %1228 = vmatprep.subr.bf16.mxu0 0
        %1229 = vmatpush1.bf16.msra.mxu0 0
        %1230 = vmatprep.subr.bf16.mxu0 0
        %1231 = vmatpush1.bf16.msra.mxu0 0
        %1232 = vmatprep.subr.bf16.mxu0 0
        %1233 = vmatpush1.bf16.msra.mxu0 0
        %1234 = vmatprep.subr.bf16.mxu0 0
        %1235 = vmatpush1.bf16.msra.mxu0 0
        %1236 = vmatprep.subr.bf16.mxu0 0
        %1237 = vmatpush1.bf16.msra.mxu0 0
        %1238 = vmatprep.subr.bf16.mxu0 0
        %1239 = vmatpush1.bf16.msra.mxu0 0
        %1240 = vmatprep.subr.bf16.mxu0 0
        %1241 = vmatpush1.bf16.msra.mxu0 %v1224
        %1242 = vmatprep.subr.bf16.mxu0 0
        %1243 = vmatpush2.bf16.msra.mxu0 0
        %1244 = vmatprep.subr.bf16.mxu0 0
        %1245 = vmatpush2.bf16.msra.mxu0 0
        %1246 = vmatprep.subr.bf16.mxu0 0
        %1247 = vmatpush2.bf16.msra.mxu0 0
        %1248 = vmatprep.subr.bf16.mxu0 0
        %1249 = vmatpush2.bf16.msra.mxu0 0
        %1250 = vmatprep.subr.bf16.mxu0 0
        %1251 = vmatpush2.bf16.msra.mxu0 0
        %1252 = vmatprep.subr.bf16.mxu0 0
        %1253 = vmatpush2.bf16.msra.mxu0 0
        %1254 = vmatprep.subr.bf16.mxu0 0
        %1255 = vmatpush2.bf16.msra.mxu0 0
        %1256 = vmatprep.subr.bf16.mxu0 0
        %1257 = vmatpush2.bf16.msra.mxu0 0
        %1258 = vmatprep.mubr.bf16.mxu0 0
        %1259 = vmatmul.mubr.bf16.gmra.mxu0 %v1221
        %v1260 = vpop.f32.mrf.mxu0
        %v1261 = vadd.f32 0.0, %v1260
        %v1262 = vpop.f32.mrf.mxu0
        %v1263 = vpop.f32.mrf.mxu0
        %v1264 = vpop.f32.mrf.mxu0
        %1265 = vdwg.mxu0
        %1266 = vrot.lane.b32.xlu0 %v824, 112
        %v1267 = vpop.permute.xlu0 %1266
        %1268 = vrot.lane.b32.xlu0 %v824, 80
        %v1269 = vpop.permute.xlu0 %1268
        %v1271 = vsel %vm829, %v1267, 0
        %v1274 = vsel %vm829, %v1269, 0
        %1276 = vmatprep.subr.bf16.mxu0 0
        %1277 = vmatpush1.bf16.xpose.msra.mxu0 0
        %1278 = vmatprep.subr.bf16.mxu0 0
        %1279 = vmatpush1.bf16.xpose.msra.mxu0 0
        %1280 = vmatprep.subr.bf16.mxu0 0
        %1281 = vmatpush1.bf16.xpose.msra.mxu0 0
        %1282 = vmatprep.subr.bf16.mxu0 0
        %1283 = vmatpush1.bf16.xpose.msra.mxu0 0
        %1284 = vmatprep.subr.bf16.mxu0 0
        %1285 = vmatpush1.bf16.xpose.msra.mxu0 0
        %1286 = vmatprep.subr.bf16.mxu0 0
        %1287 = vmatpush1.bf16.xpose.msra.mxu0 0
        %1288 = vmatprep.subr.bf16.mxu0 0
        %1289 = vmatpush1.bf16.xpose.msra.mxu0 0
        %1290 = vmatprep.subr.bf16.mxu0 0
        %1291 = vmatpush1.bf16.xpose.msra.mxu0 %v1274
        %1292 = vmatprep.subr.bf16.mxu0 0
        %1293 = vmatpush2.bf16.xpose.msra.mxu0 0
        %1294 = vmatprep.subr.bf16.mxu0 0
        %1295 = vmatpush2.bf16.xpose.msra.mxu0 0
        %1296 = vmatprep.subr.bf16.mxu0 0
        %1297 = vmatpush2.bf16.xpose.msra.mxu0 0
        %1298 = vmatprep.subr.bf16.mxu0 0
        %1299 = vmatpush2.bf16.xpose.msra.mxu0 0
        %1300 = vmatprep.subr.bf16.mxu0 0
        %1301 = vmatpush2.bf16.xpose.msra.mxu0 0
        %1302 = vmatprep.subr.bf16.mxu0 0
        %1303 = vmatpush2.bf16.xpose.msra.mxu0 0
        %1304 = vmatprep.subr.bf16.mxu0 0
        %1305 = vmatpush2.bf16.xpose.msra.mxu0 0
        %1306 = vmatprep.subr.bf16.mxu0 0
        %1307 = vmatpush2.bf16.xpose.msra.mxu0 0
        %1308 = vmatprep.mubr.bf16.mxu0 0
        %1309 = vmatmul.mubr.bf16.gmra.mxu0 %v1271
        %v1310 = vpop.f32.mrf.mxu0
        %v1311 = vadd.f32 %v817, %v1310
        %v1312 = vpop.f32.mrf.mxu0
        %v1313 = vpop.f32.mrf.mxu0
        %v1314 = vpop.f32.mrf.mxu0
        %1315 = vdwg.mxu0
        %1316 = vrot.lane.b32.xlu0 %v825, 112
        %v1317 = vpop.permute.xlu0 %1316
        %1318 = vrot.lane.b32.xlu0 %v825, 80
        %v1319 = vpop.permute.xlu0 %1318
        %v1321 = vsel %vm829, %v1317, 0
        %v1324 = vsel %vm829, %v1319, 0
        %1326 = vmatprep.subr.bf16.mxu0 0
        %1327 = vmatpush1.bf16.xpose.msra.mxu0 0
        %1328 = vmatprep.subr.bf16.mxu0 0
        %1329 = vmatpush1.bf16.xpose.msra.mxu0 0
        %1330 = vmatprep.subr.bf16.mxu0 0
        %1331 = vmatpush1.bf16.xpose.msra.mxu0 0
        %1332 = vmatprep.subr.bf16.mxu0 0
        %1333 = vmatpush1.bf16.xpose.msra.mxu0 0
        %1334 = vmatprep.subr.bf16.mxu0 0
        %1335 = vmatpush1.bf16.xpose.msra.mxu0 0
        %1336 = vmatprep.subr.bf16.mxu0 0
        %1337 = vmatpush1.bf16.xpose.msra.mxu0 0
        %1338 = vmatprep.subr.bf16.mxu0 0
        %1339 = vmatpush1.bf16.xpose.msra.mxu0 0
        %1340 = vmatprep.subr.bf16.mxu0 0
        %1341 = vmatpush1.bf16.xpose.msra.mxu0 %v1324
        %1342 = vmatprep.subr.bf16.mxu0 0
        %1343 = vmatpush2.bf16.xpose.msra.mxu0 0
        %1344 = vmatprep.subr.bf16.mxu0 0
        %1345 = vmatpush2.bf16.xpose.msra.mxu0 0
        %1346 = vmatprep.subr.bf16.mxu0 0
        %1347 = vmatpush2.bf16.xpose.msra.mxu0 0
        %1348 = vmatprep.subr.bf16.mxu0 0
        %1349 = vmatpush2.bf16.xpose.msra.mxu0 0
        %1350 = vmatprep.subr.bf16.mxu0 0
        %1351 = vmatpush2.bf16.xpose.msra.mxu0 0
        %1352 = vmatprep.subr.bf16.mxu0 0
        %1353 = vmatpush2.bf16.xpose.msra.mxu0 0
        %1354 = vmatprep.subr.bf16.mxu0 0
        %1355 = vmatpush2.bf16.xpose.msra.mxu0 0
        %1356 = vmatprep.subr.bf16.mxu0 0
        %1357 = vmatpush2.bf16.xpose.msra.mxu0 0
        %1358 = vmatprep.mubr.bf16.mxu0 0
        %1359 = vmatmul.mubr.bf16.gmra.mxu0 %v1321
        %v1360 = vpop.f32.mrf.mxu0
        %v1361 = vadd.f32 %v821, %v1360
        %v1362 = vpop.f32.mrf.mxu0
        %v1363 = vpop.f32.mrf.mxu0
        %v1364 = vpop.f32.mrf.mxu0
        %1365 = vdwg.mxu0
        %v1366 = vsel %vm829, %v1311, -inf
        %1367 = vmax.xlane.f32.xlu0 %v1366
        %v1368 = vpop.xlane.xlu0 %1367
        %v1369 = vsel %vm829, %v1361, -inf
        %1370 = vmax.xlane.f32.xlu0 %v1369
        %v1371 = vpop.xlane.xlu0 %1370
        %v1372 = vsub.f32 %v1311, %v1368
        %v1373 = vsub.f32 %v1361, %v1371
        %v1374 = vmul.f32 %v1372, 1.442695
        %v1375 = vpow.pop %v1374
        %v1376 = vmul.f32 %v1373, 1.442695
        %v1377 = vpow.pop %v1376
        %v1378 = vsel %vm829, %v1375, 0.0
        %1379 = vadd.xlane.f32.xlu0 %v1378
        %v1380 = vpop.xlane.xlu0 %1379
        %v1381 = vsel %vm829, %v1377, 0.0
        %1382 = vadd.xlane.f32.xlu0 %v1381
        %v1383 = vpop.xlane.xlu0 %1382
        %v1384 = vrcp.pop %v1380
        %v1385 = vrcp.pop %v1383
        %v1386 = vmul.f32 %v1375, %v1384
        %v1387 = vmul.f32 %v1377, %v1385
        %v1388 = vpack.c.bf16 %v1386, %v1386
        %v1389 = vpack.c.bf16 %v1387, %v1387
        %1390 = vrot.lane.b32.xlu0 %v824, 48
        %v1391 = vpop.permute.xlu0 %1390
        %v1393 = vsel %vm829, %v1388, 0
        %v1396 = vsel %vm954, %v1391, 0
        %1398 = vmatprep.subr.bf16.mxu0 0
        %1399 = vmatpush1.bf16.msra.mxu0 0
        %1400 = vmatprep.subr.bf16.mxu0 0
        %1401 = vmatpush1.bf16.msra.mxu0 0
        %1402 = vmatprep.subr.bf16.mxu0 0
        %1403 = vmatpush1.bf16.msra.mxu0 0
        %1404 = vmatprep.subr.bf16.mxu0 0
        %1405 = vmatpush1.bf16.msra.mxu0 0
        %1406 = vmatprep.subr.bf16.mxu0 0
        %1407 = vmatpush1.bf16.msra.mxu0 0
        %1408 = vmatprep.subr.bf16.mxu0 0
        %1409 = vmatpush1.bf16.msra.mxu0 0
        %1410 = vmatprep.subr.bf16.mxu0 0
        %1411 = vmatpush1.bf16.msra.mxu0 0
        %1412 = vmatprep.subr.bf16.mxu0 0
        %1413 = vmatpush1.bf16.msra.mxu0 %v1396
        %1414 = vmatprep.subr.bf16.mxu0 0
        %1415 = vmatpush2.bf16.msra.mxu0 0
        %1416 = vmatprep.subr.bf16.mxu0 0
        %1417 = vmatpush2.bf16.msra.mxu0 0
        %1418 = vmatprep.subr.bf16.mxu0 0
        %1419 = vmatpush2.bf16.msra.mxu0 0
        %1420 = vmatprep.subr.bf16.mxu0 0
        %1421 = vmatpush2.bf16.msra.mxu0 0
        %1422 = vmatprep.subr.bf16.mxu0 0
        %1423 = vmatpush2.bf16.msra.mxu0 0
        %1424 = vmatprep.subr.bf16.mxu0 0
        %1425 = vmatpush2.bf16.msra.mxu0 0
        %1426 = vmatprep.subr.bf16.mxu0 0
        %1427 = vmatpush2.bf16.msra.mxu0 0
        %1428 = vmatprep.subr.bf16.mxu0 0
        %1429 = vmatpush2.bf16.msra.mxu0 0
        %1430 = vmatprep.mubr.bf16.mxu0 0
        %1431 = vmatmul.mubr.bf16.gmra.mxu0 %v1393
        %v1432 = vpop.f32.mrf.mxu0
        %v1433 = vadd.f32 0.0, %v1432
        %v1434 = vpop.f32.mrf.mxu0
        %v1435 = vpop.f32.mrf.mxu0
        %v1436 = vpop.f32.mrf.mxu0
        %1437 = vdwg.mxu0
        %1438 = vrot.lane.b32.xlu0 %v825, 48
        %v1439 = vpop.permute.xlu0 %1438
        %v1441 = vsel %vm829, %v1389, 0
        %v1444 = vsel %vm954, %v1439, 0
        %1446 = vmatprep.subr.bf16.mxu0 0
        %1447 = vmatpush1.bf16.msra.mxu0 0
        %1448 = vmatprep.subr.bf16.mxu0 0
        %1449 = vmatpush1.bf16.msra.mxu0 0
        %1450 = vmatprep.subr.bf16.mxu0 0
        %1451 = vmatpush1.bf16.msra.mxu0 0
        %1452 = vmatprep.subr.bf16.mxu0 0
        %1453 = vmatpush1.bf16.msra.mxu0 0
        %1454 = vmatprep.subr.bf16.mxu0 0
        %1455 = vmatpush1.bf16.msra.mxu0 0
        %1456 = vmatprep.subr.bf16.mxu0 0
        %1457 = vmatpush1.bf16.msra.mxu0 0
        %1458 = vmatprep.subr.bf16.mxu0 0
        %1459 = vmatpush1.bf16.msra.mxu0 0
        %1460 = vmatprep.subr.bf16.mxu0 0
        %1461 = vmatpush1.bf16.msra.mxu0 %v1444
        %1462 = vmatprep.subr.bf16.mxu0 0
        %1463 = vmatpush2.bf16.msra.mxu0 0
        %1464 = vmatprep.subr.bf16.mxu0 0
        %1465 = vmatpush2.bf16.msra.mxu0 0
        %1466 = vmatprep.subr.bf16.mxu0 0
        %1467 = vmatpush2.bf16.msra.mxu0 0
        %1468 = vmatprep.subr.bf16.mxu0 0
        %1469 = vmatpush2.bf16.msra.mxu0 0
        %1470 = vmatprep.subr.bf16.mxu0 0
        %1471 = vmatpush2.bf16.msra.mxu0 0
        %1472 = vmatprep.subr.bf16.mxu0 0
        %1473 = vmatpush2.bf16.msra.mxu0 0
        %1474 = vmatprep.subr.bf16.mxu0 0
        %1475 = vmatpush2.bf16.msra.mxu0 0
        %1476 = vmatprep.subr.bf16.mxu0 0
        %1477 = vmatpush2.bf16.msra.mxu0 0
        %1478 = vmatprep.mubr.bf16.mxu0 0
        %1479 = vmatmul.mubr.bf16.gmra.mxu0 %v1441
        %v1480 = vpop.f32.mrf.mxu0
        %v1481 = vadd.f32 0.0, %v1480
        %v1482 = vpop.f32.mrf.mxu0
        %v1483 = vpop.f32.mrf.mxu0
        %v1484 = vpop.f32.mrf.mxu0
        %1485 = vdwg.mxu0
        %1486 = vrot.lane.b32.xlu0 %v824, 104
        %v1487 = vpop.permute.xlu0 %1486
        %1488 = vrot.lane.b32.xlu0 %v824, 72
        %v1489 = vpop.permute.xlu0 %1488
        %v1491 = vsel %vm829, %v1487, 0
        %v1494 = vsel %vm829, %v1489, 0
        %1496 = vmatprep.subr.bf16.mxu0 0
        %1497 = vmatpush1.bf16.xpose.msra.mxu0 0
        %1498 = vmatprep.subr.bf16.mxu0 0
        %1499 = vmatpush1.bf16.xpose.msra.mxu0 0
        %1500 = vmatprep.subr.bf16.mxu0 0
        %1501 = vmatpush1.bf16.xpose.msra.mxu0 0
        %1502 = vmatprep.subr.bf16.mxu0 0
        %1503 = vmatpush1.bf16.xpose.msra.mxu0 0
        %1504 = vmatprep.subr.bf16.mxu0 0
        %1505 = vmatpush1.bf16.xpose.msra.mxu0 0
        %1506 = vmatprep.subr.bf16.mxu0 0
        %1507 = vmatpush1.bf16.xpose.msra.mxu0 0
        %1508 = vmatprep.subr.bf16.mxu0 0
        %1509 = vmatpush1.bf16.xpose.msra.mxu0 0
        %1510 = vmatprep.subr.bf16.mxu0 0
        %1511 = vmatpush1.bf16.xpose.msra.mxu0 %v1494
        %1512 = vmatprep.subr.bf16.mxu0 0
        %1513 = vmatpush2.bf16.xpose.msra.mxu0 0
        %1514 = vmatprep.subr.bf16.mxu0 0
        %1515 = vmatpush2.bf16.xpose.msra.mxu0 0
        %1516 = vmatprep.subr.bf16.mxu0 0
        %1517 = vmatpush2.bf16.xpose.msra.mxu0 0
        %1518 = vmatprep.subr.bf16.mxu0 0
        %1519 = vmatpush2.bf16.xpose.msra.mxu0 0
        %1520 = vmatprep.subr.bf16.mxu0 0
        %1521 = vmatpush2.bf16.xpose.msra.mxu0 0
        %1522 = vmatprep.subr.bf16.mxu0 0
        %1523 = vmatpush2.bf16.xpose.msra.mxu0 0
        %1524 = vmatprep.subr.bf16.mxu0 0
        %1525 = vmatpush2.bf16.xpose.msra.mxu0 0
        %1526 = vmatprep.subr.bf16.mxu0 0
        %1527 = vmatpush2.bf16.xpose.msra.mxu0 0
        %1528 = vmatprep.mubr.bf16.mxu0 0
        %1529 = vmatmul.mubr.bf16.gmra.mxu0 %v1491
        %v1530 = vpop.f32.mrf.mxu0
        %v1531 = vadd.f32 %v817, %v1530
        %v1532 = vpop.f32.mrf.mxu0
        %v1533 = vpop.f32.mrf.mxu0
        %v1534 = vpop.f32.mrf.mxu0
        %1535 = vdwg.mxu0
        %1536 = vrot.lane.b32.xlu0 %v825, 104
        %v1537 = vpop.permute.xlu0 %1536
        %1538 = vrot.lane.b32.xlu0 %v825, 72
        %v1539 = vpop.permute.xlu0 %1538
        %v1541 = vsel %vm829, %v1537, 0
        %v1544 = vsel %vm829, %v1539, 0
        %1546 = vmatprep.subr.bf16.mxu0 0
        %1547 = vmatpush1.bf16.xpose.msra.mxu0 0
        %1548 = vmatprep.subr.bf16.mxu0 0
        %1549 = vmatpush1.bf16.xpose.msra.mxu0 0
        %1550 = vmatprep.subr.bf16.mxu0 0
        %1551 = vmatpush1.bf16.xpose.msra.mxu0 0
        %1552 = vmatprep.subr.bf16.mxu0 0
        %1553 = vmatpush1.bf16.xpose.msra.mxu0 0
        %1554 = vmatprep.subr.bf16.mxu0 0
        %1555 = vmatpush1.bf16.xpose.msra.mxu0 0
        %1556 = vmatprep.subr.bf16.mxu0 0
        %1557 = vmatpush1.bf16.xpose.msra.mxu0 0
        %1558 = vmatprep.subr.bf16.mxu0 0
        %1559 = vmatpush1.bf16.xpose.msra.mxu0 0
        %1560 = vmatprep.subr.bf16.mxu0 0
        %1561 = vmatpush1.bf16.xpose.msra.mxu0 %v1544
        %1562 = vmatprep.subr.bf16.mxu0 0
        %1563 = vmatpush2.bf16.xpose.msra.mxu0 0
        %1564 = vmatprep.subr.bf16.mxu0 0
        %1565 = vmatpush2.bf16.xpose.msra.mxu0 0
        %1566 = vmatprep.subr.bf16.mxu0 0
        %1567 = vmatpush2.bf16.xpose.msra.mxu0 0
        %1568 = vmatprep.subr.bf16.mxu0 0
        %1569 = vmatpush2.bf16.xpose.msra.mxu0 0
        %1570 = vmatprep.subr.bf16.mxu0 0
        %1571 = vmatpush2.bf16.xpose.msra.mxu0 0
        %1572 = vmatprep.subr.bf16.mxu0 0
        %1573 = vmatpush2.bf16.xpose.msra.mxu0 0
        %1574 = vmatprep.subr.bf16.mxu0 0
        %1575 = vmatpush2.bf16.xpose.msra.mxu0 0
        %1576 = vmatprep.subr.bf16.mxu0 0
        %1577 = vmatpush2.bf16.xpose.msra.mxu0 0
        %1578 = vmatprep.mubr.bf16.mxu0 0
        %1579 = vmatmul.mubr.bf16.gmra.mxu0 %v1541
        %v1580 = vpop.f32.mrf.mxu0
        %v1581 = vadd.f32 %v821, %v1580
        %v1582 = vpop.f32.mrf.mxu0
        %v1583 = vpop.f32.mrf.mxu0
        %v1584 = vpop.f32.mrf.mxu0
        %1585 = vdwg.mxu0
        %v1586 = vsel %vm829, %v1531, -inf
        %1587 = vmax.xlane.f32.xlu0 %v1586
        %v1588 = vpop.xlane.xlu0 %1587
        %v1589 = vsel %vm829, %v1581, -inf
        %1590 = vmax.xlane.f32.xlu0 %v1589
        %v1591 = vpop.xlane.xlu0 %1590
        %v1592 = vsub.f32 %v1531, %v1588
        %v1593 = vsub.f32 %v1581, %v1591
        %v1594 = vmul.f32 %v1592, 1.442695
        %v1595 = vpow.pop %v1594
        %v1596 = vmul.f32 %v1593, 1.442695
        %v1597 = vpow.pop %v1596
        %v1598 = vsel %vm829, %v1595, 0.0
        %1599 = vadd.xlane.f32.xlu0 %v1598
        %v1600 = vpop.xlane.xlu0 %1599
        %v1601 = vsel %vm829, %v1597, 0.0
        %1602 = vadd.xlane.f32.xlu0 %v1601
        %v1603 = vpop.xlane.xlu0 %1602
        %v1604 = vrcp.pop %v1600
        %v1605 = vrcp.pop %v1603
        %v1606 = vmul.f32 %v1595, %v1604
        %v1607 = vmul.f32 %v1597, %v1605
        %v1608 = vpack.c.bf16 %v1606, %v1606
        %v1609 = vpack.c.bf16 %v1607, %v1607
        %1610 = vrot.lane.b32.xlu0 %v824, 40
        %v1611 = vpop.permute.xlu0 %1610
        %v1613 = vsel %vm829, %v1608, 0
        %v1616 = vsel %vm954, %v1611, 0
        %1618 = vmatprep.subr.bf16.mxu0 0
        %1619 = vmatpush1.bf16.msra.mxu0 0
        %1620 = vmatprep.subr.bf16.mxu0 0
        %1621 = vmatpush1.bf16.msra.mxu0 0
        %1622 = vmatprep.subr.bf16.mxu0 0
        %1623 = vmatpush1.bf16.msra.mxu0 0
        %1624 = vmatprep.subr.bf16.mxu0 0
        %1625 = vmatpush1.bf16.msra.mxu0 0
        %1626 = vmatprep.subr.bf16.mxu0 0
        %1627 = vmatpush1.bf16.msra.mxu0 0
        %1628 = vmatprep.subr.bf16.mxu0 0
        %1629 = vmatpush1.bf16.msra.mxu0 0
        %1630 = vmatprep.subr.bf16.mxu0 0
        %1631 = vmatpush1.bf16.msra.mxu0 0
        %1632 = vmatprep.subr.bf16.mxu0 0
        %1633 = vmatpush1.bf16.msra.mxu0 %v1616
        %1634 = vmatprep.subr.bf16.mxu0 0
        %1635 = vmatpush2.bf16.msra.mxu0 0
        %1636 = vmatprep.subr.bf16.mxu0 0
        %1637 = vmatpush2.bf16.msra.mxu0 0
        %1638 = vmatprep.subr.bf16.mxu0 0
        %1639 = vmatpush2.bf16.msra.mxu0 0
        %1640 = vmatprep.subr.bf16.mxu0 0
        %1641 = vmatpush2.bf16.msra.mxu0 0
        %1642 = vmatprep.subr.bf16.mxu0 0
        %1643 = vmatpush2.bf16.msra.mxu0 0
        %1644 = vmatprep.subr.bf16.mxu0 0
        %1645 = vmatpush2.bf16.msra.mxu0 0
        %1646 = vmatprep.subr.bf16.mxu0 0
        %1647 = vmatpush2.bf16.msra.mxu0 0
        %1648 = vmatprep.subr.bf16.mxu0 0
        %1649 = vmatpush2.bf16.msra.mxu0 0
        %1650 = vmatprep.mubr.bf16.mxu0 0
        %1651 = vmatmul.mubr.bf16.gmra.mxu0 %v1613
        %v1652 = vpop.f32.mrf.mxu0
        %v1653 = vadd.f32 0.0, %v1652
        %v1654 = vpop.f32.mrf.mxu0
        %v1655 = vpop.f32.mrf.mxu0
        %v1656 = vpop.f32.mrf.mxu0
        %1657 = vdwg.mxu0
        %1658 = vrot.lane.b32.xlu0 %v825, 40
        %v1659 = vpop.permute.xlu0 %1658
        %v1661 = vsel %vm829, %v1609, 0
        %v1664 = vsel %vm954, %v1659, 0
        %1666 = vmatprep.subr.bf16.mxu0 0
        %1667 = vmatpush1.bf16.msra.mxu0 0
        %1668 = vmatprep.subr.bf16.mxu0 0
        %1669 = vmatpush1.bf16.msra.mxu0 0
        %1670 = vmatprep.subr.bf16.mxu0 0
        %1671 = vmatpush1.bf16.msra.mxu0 0
        %1672 = vmatprep.subr.bf16.mxu0 0
        %1673 = vmatpush1.bf16.msra.mxu0 0
        %1674 = vmatprep.subr.bf16.mxu0 0
        %1675 = vmatpush1.bf16.msra.mxu0 0
        %1676 = vmatprep.subr.bf16.mxu0 0
        %1677 = vmatpush1.bf16.msra.mxu0 0
        %1678 = vmatprep.subr.bf16.mxu0 0
        %1679 = vmatpush1.bf16.msra.mxu0 0
        %1680 = vmatprep.subr.bf16.mxu0 0
        %1681 = vmatpush1.bf16.msra.mxu0 %v1664
        %1682 = vmatprep.subr.bf16.mxu0 0
        %1683 = vmatpush2.bf16.msra.mxu0 0
        %1684 = vmatprep.subr.bf16.mxu0 0
        %1685 = vmatpush2.bf16.msra.mxu0 0
        %1686 = vmatprep.subr.bf16.mxu0 0
        %1687 = vmatpush2.bf16.msra.mxu0 0
        %1688 = vmatprep.subr.bf16.mxu0 0
        %1689 = vmatpush2.bf16.msra.mxu0 0
        %1690 = vmatprep.subr.bf16.mxu0 0
        %1691 = vmatpush2.bf16.msra.mxu0 0
        %1692 = vmatprep.subr.bf16.mxu0 0
        %1693 = vmatpush2.bf16.msra.mxu0 0
        %1694 = vmatprep.subr.bf16.mxu0 0
        %1695 = vmatpush2.bf16.msra.mxu0 0
        %1696 = vmatprep.subr.bf16.mxu0 0
        %1697 = vmatpush2.bf16.msra.mxu0 0
        %1698 = vmatprep.mubr.bf16.mxu0 0
        %1699 = vmatmul.mubr.bf16.gmra.mxu0 %v1661
        %v1700 = vpop.f32.mrf.mxu0
        %v1701 = vadd.f32 0.0, %v1700
        %v1702 = vpop.f32.mrf.mxu0
        %v1703 = vpop.f32.mrf.mxu0
        %v1704 = vpop.f32.mrf.mxu0
        %1705 = vdwg.mxu0
        %1708 = vrot.lane.b32.xlu0 %v1213, 8
        %v1709 = vpop.permute.xlu0 %1708
        %1710 = vrot.lane.b32.xlu0 %v1261, 8
        %v1711 = vpop.permute.xlu0 %1710
        %1716 = vrot.lane.b32.xlu0 %v1433, 16
        %v1717 = vpop.permute.xlu0 %1716
        %1718 = vrot.lane.b32.xlu0 %v1481, 16
        %v1719 = vpop.permute.xlu0 %1718
        %1724 = vrot.lane.b32.xlu0 %v1653, 24
        %v1725 = vpop.permute.xlu0 %1724
        %1726 = vrot.lane.b32.xlu0 %v1701, 24
        %v1727 = vpop.permute.xlu0 %1726
        %v1730 = vsel %vm829, %v993, %v1709
        %v1731 = vsel %vm829, %v1041, %v1711
        %vm1732 = vcmask 130048
        %v1733 = vsel %vm1732, %v1730, %v1717
        %v1734 = vsel %vm1732, %v1731, %v1719
        %vm1735 = vcmask 195584
        %v1736 = vsel %vm1735, %v1733, %v1725
        %v1737 = vsel %vm1735, %v1734, %v1727
        %v1738 = vpack.c.bf16 %v1737, %v1736
        %v1739 = vld [vmem:[%s648] sm:$0xf]
        %v1740 = vld [vmem:[%s648 + $0x4] sm:$0xf]
        %v1741 = vld [vmem:[%s648 + $0x8] sm:$0xf]
        %v1742 = vld [vmem:[%s648 + $0xc] sm:$0xf]
        %v1743 = vld [vmem:[%s651] sm:$0x1]
        %v1745 = vlaneseq
        %v1746 = vshrl.u32 %v1745, 7
        %v1747 = vsub.s32 0, %v1746
        %v1748 = vrot.slane %v1743, %v1747
        %v1754 = vunpack.c.l.b16 %v1739
        %v1755 = vunpack.c.l.b16 %v1740
        %v1756 = vunpack.c.l.b16 %v1741
        %v1757 = vunpack.c.l.b16 %v1742
        %v1758 = vpack.c.b16 %v1755, %v1754
        %v1759 = vpack.c.b16 %v1757, %v1756
        %v1763 = vsel %vm765, %v1738, 0
        %1765 = vmatprep.subr.bf16.mxu0 0
        %1766 = vmatpush1.bf16.msra.mxu0 0
        %1767 = vmatprep.subr.bf16.mxu0 0
        %1768 = vmatpush1.bf16.msra.mxu0 0
        %1769 = vmatprep.subr.bf16.mxu0 0
        %1770 = vmatpush1.bf16.msra.mxu0 0
        %1771 = vmatprep.subr.bf16.mxu0 0
        %1772 = vmatpush1.bf16.msra.mxu0 0
        %1773 = vmatprep.subr.bf16.mxu0 0
        %1774 = vmatpush1.bf16.msra.mxu0 0
        %1775 = vmatprep.subr.bf16.mxu0 0
        %1776 = vmatpush1.bf16.msra.mxu0 0
        %1777 = vmatprep.subr.bf16.mxu0 0
        %1778 = vmatpush1.bf16.msra.mxu0 %v1759
        %1779 = vmatprep.subr.bf16.mxu0 0
        %1780 = vmatpush1.bf16.msra.mxu0 %v1758
        %1781 = vmatprep.subr.bf16.mxu0 0
        %1782 = vmatpush2.bf16.msra.mxu0 0
        %1783 = vmatprep.subr.bf16.mxu0 0
        %1784 = vmatpush2.bf16.msra.mxu0 0
        %1785 = vmatprep.subr.bf16.mxu0 0
        %1786 = vmatpush2.bf16.msra.mxu0 0
        %1787 = vmatprep.subr.bf16.mxu0 0
        %1788 = vmatpush2.bf16.msra.mxu0 0
        %1789 = vmatprep.subr.bf16.mxu0 0
        %1790 = vmatpush2.bf16.msra.mxu0 0
        %1791 = vmatprep.subr.bf16.mxu0 0
        %1792 = vmatpush2.bf16.msra.mxu0 0
        %1793 = vmatprep.subr.bf16.mxu0 0
        %1794 = vmatpush2.bf16.msra.mxu0 0
        %1795 = vmatprep.subr.bf16.mxu0 0
        %1796 = vmatpush2.bf16.msra.mxu0 0
        %1797 = vmatprep.mubr.bf16.mxu0 0
        %1798 = vmatmul.mubr.bf16.gmra.mxu0 %v1763
        %v1799 = vpop.f32.mrf.mxu0
        %v1800 = vadd.f32 %v1748, %v1799
        %v1801 = vpop.f32.mrf.mxu0
        %v1802 = vpop.f32.mrf.mxu0
        %v1803 = vadd.f32 %v1748, %v1802
        %v1804 = vpop.f32.mrf.mxu0
        %1805 = vdwg.mxu0
        %v1806 = vadd.f32 %v1800, %v739
        %v1807 = vadd.f32 %v1803, %v740
        %v1808 = vld [vmem:[%s654] sm:$0x1]
        %v1809 = vld [vmem:[%s657] sm:$0x1]
        %v1810 = vsel %vm765, %v1806, 0.0
        %1811 = vadd.xlane.f32.xlu0 %v1810
        %v1812 = vpop.xlane.xlu0 %1811
        %v1813 = vsel %vm765, %v1807, 0.0
        %1814 = vadd.xlane.f32.xlu0 %v1813
        %v1815 = vpop.xlane.xlu0 %1814
        %v1816 = vrcp.pop 32.0
        %v1817 = vmul.f32 %v1812, %v1816
        %v1818 = vmul.f32 %v1815, %v1816
        %v1819 = vmul.f32 %v1806, %v1806
        %v1820 = vmul.f32 %v1807, %v1807
        %v1821 = vsel %vm765, %v1819, 0.0
        %1822 = vadd.xlane.f32.xlu0 %v1821
        %v1823 = vpop.xlane.xlu0 %1822
        %v1824 = vsel %vm765, %v1820, 0.0
        %1825 = vadd.xlane.f32.xlu0 %v1824
        %v1826 = vpop.xlane.xlu0 %1825
        %v1827 = vmul.f32 %v1823, %v1816
        %v1828 = vmul.f32 %v1826, %v1816
        %v1829 = vmul.f32 %v1817, %v1817
        %v1830 = vmul.f32 %v1818, %v1818
        %v1831 = vsub.f32 %v1827, %v1829
        %v1832 = vsub.f32 %v1828, %v1830
        %v1833 = vsub.f32 %v1806, %v1817
        %v1834 = vsub.f32 %v1807, %v1818
        %v1835 = vadd.f32 %v1831, 1e-12
        %v1836 = vadd.f32 %v1832, 1e-12
        %v1837 = vrsqrt.pop %v1835
        %v1838 = vrsqrt.pop %v1836
        %v1839 = vmul.f32 %v1833, %v1837
        %v1840 = vmul.f32 %v1834, %v1838
        %v1842 = vlaneseq
        %v1843 = vshrl.u32 %v1842, 7
        %v1844 = vsub.s32 0, %v1843
        %v1845 = vrot.slane %v1808, %v1844
        %v1847 = vmul.f32 %v1839, %v1845
        %v1848 = vmul.f32 %v1840, %v1845
        %v1850 = vlaneseq
        %v1851 = vshrl.u32 %v1850, 7
        %v1852 = vsub.s32 0, %v1851
        %v1853 = vrot.slane %v1809, %v1852
        %v1855 = vadd.f32 %v1847, %v1853
        %v1856 = vadd.f32 %v1848, %v1853
        %v1857 = vpack.c.bf16 %v1856, %v1855
        %v1858 = vld [vmem:[%s662] sm:$0xf]
        %v1859 = vld [vmem:[%s662 + $0x4] sm:$0xf]
        %v1860 = vld [vmem:[%s662 + $0x8] sm:$0xf]
        %v1861 = vld [vmem:[%s662 + $0xc] sm:$0xf]
        %v1862 = vld [vmem:[%s665] sm:$0x1]
        %v1864 = vlaneseq
        %v1865 = vshrl.u32 %v1864, 7
        %v1866 = vsub.s32 0, %v1865
        %v1867 = vrot.slane %v1862, %v1866
        %v1873 = vunpack.c.l.b16 %v1858
        %v1874 = vunpack.c.l.b16 %v1859
        %v1875 = vunpack.c.l.b16 %v1860
        %v1876 = vunpack.c.l.b16 %v1861
        %v1877 = vpack.c.b16 %v1874, %v1873
        %v1878 = vpack.c.b16 %v1876, %v1875
        %v1882 = vsel %vm765, %v1857, 0
        %1884 = vmatprep.subr.bf16.mxu0 0
        %1885 = vmatpush1.bf16.msra.mxu0 0
        %1886 = vmatprep.subr.bf16.mxu0 0
        %1887 = vmatpush1.bf16.msra.mxu0 0
        %1888 = vmatprep.subr.bf16.mxu0 0
        %1889 = vmatpush1.bf16.msra.mxu0 0
        %1890 = vmatprep.subr.bf16.mxu0 0
        %1891 = vmatpush1.bf16.msra.mxu0 0
        %1892 = vmatprep.subr.bf16.mxu0 0
        %1893 = vmatpush1.bf16.msra.mxu0 0
        %1894 = vmatprep.subr.bf16.mxu0 0
        %1895 = vmatpush1.bf16.msra.mxu0 0
        %1896 = vmatprep.subr.bf16.mxu0 0
        %1897 = vmatpush1.bf16.msra.mxu0 %v1878
        %1898 = vmatprep.subr.bf16.mxu0 0
        %1899 = vmatpush1.bf16.msra.mxu0 %v1877
        %1900 = vmatprep.subr.bf16.mxu0 0
        %1901 = vmatpush2.bf16.msra.mxu0 0
        %1902 = vmatprep.subr.bf16.mxu0 0
        %1903 = vmatpush2.bf16.msra.mxu0 0
        %1904 = vmatprep.subr.bf16.mxu0 0
        %1905 = vmatpush2.bf16.msra.mxu0 0
        %1906 = vmatprep.subr.bf16.mxu0 0
        %1907 = vmatpush2.bf16.msra.mxu0 0
        %1908 = vmatprep.subr.bf16.mxu0 0
        %1909 = vmatpush2.bf16.msra.mxu0 0
        %1910 = vmatprep.subr.bf16.mxu0 0
        %1911 = vmatpush2.bf16.msra.mxu0 0
        %1912 = vmatprep.subr.bf16.mxu0 0
        %1913 = vmatpush2.bf16.msra.mxu0 0
        %1914 = vmatprep.subr.bf16.mxu0 0
        %1915 = vmatpush2.bf16.msra.mxu0 0
        %1916 = vmatprep.mubr.bf16.mxu0 0
        %1917 = vmatmul.mubr.bf16.gmra.mxu0 %v1882
        %v1918 = vpop.f32.mrf.mxu0
        %v1919 = vadd.f32 %v1867, %v1918
        %v1920 = vpop.f32.mrf.mxu0
        %v1921 = vpop.f32.mrf.mxu0
        %v1922 = vadd.f32 %v1867, %v1921
        %v1923 = vpop.f32.mrf.mxu0
        %1924 = vdwg.mxu0
        %v1925 = vmul.f32 %v1919, %v1919
        %v1926 = vmul.f32 %v1922, %v1922
        %v1927 = vmul.f32 %v1919, %v1925
        %v1928 = vmul.f32 %v1922, %v1926
        %v1929 = vmul.f32 %v1927, 0.044715
        %v1930 = vmul.f32 %v1928, 0.044715
        %v1931 = vadd.f32 %v1919, %v1929
        %v1932 = vadd.f32 %v1922, %v1930
        %v1933 = vmul.f32 %v1931, 0.7978846
        %v1934 = vmul.f32 %v1932, 0.7978846
        %v1935 = vtanh.pop %v1933
        %v1936 = vtanh.pop %v1934
        %v1937 = vadd.f32 %v1935, 1.0
        %v1938 = vadd.f32 %v1936, 1.0
        %v1939 = vmul.f32 %v1937, 0.5
        %v1940 = vmul.f32 %v1938, 0.5
        %v1941 = vmul.f32 %v1919, %v1939
        %v1942 = vmul.f32 %v1922, %v1940
        %v1943 = vpack.c.bf16 %v1942, %v1941
        %v1944 = vld [vmem:[%s670] sm:$0xf]
        %v1945 = vld [vmem:[%s670 + $0x4] sm:$0xf]
        %v1946 = vld [vmem:[%s670 + $0x8] sm:$0xf]
        %v1947 = vld [vmem:[%s670 + $0xc] sm:$0xf]
        %v1948 = vld [vmem:[%s670 + $0x10] sm:$0xf]
        %v1949 = vld [vmem:[%s670 + $0x14] sm:$0xf]
        %v1950 = vld [vmem:[%s670 + $0x18] sm:$0xf]
        %v1951 = vld [vmem:[%s670 + $0x1c] sm:$0xf]
        %v1952 = vld [vmem:[%s673] sm:$0x1]
        %v1954 = vlaneseq
        %v1955 = vshrl.u32 %v1954, 7
        %v1956 = vsub.s32 0, %v1955
        %v1957 = vrot.slane %v1952, %v1956
        %v1967 = vunpack.c.l.b16 %v1944
        %v1968 = vunpack.c.l.b16 %v1945
        %v1969 = vunpack.c.l.b16 %v1946
        %v1970 = vunpack.c.l.b16 %v1947
        %v1971 = vunpack.c.l.b16 %v1948
        %v1972 = vunpack.c.l.b16 %v1949
        %v1973 = vunpack.c.l.b16 %v1950
        %v1974 = vunpack.c.l.b16 %v1951
        %v1975 = vpack.c.b16 %v1968, %v1967
        %v1976 = vpack.c.b16 %v1970, %v1969
        %v1977 = vpack.c.b16 %v1972, %v1971
        %v1978 = vpack.c.b16 %v1974, %v1973
        %vm1983 = vcmask 523264
        %v1985 = vsel %vm1983, %v1943, 0
        %1987 = vmatprep.subr.bf16.mxu0 0
        %1988 = vmatpush1.bf16.msra.mxu0 0
        %1989 = vmatprep.subr.bf16.mxu0 0
        %1990 = vmatpush1.bf16.msra.mxu0 0
        %1991 = vmatprep.subr.bf16.mxu0 0
        %1992 = vmatpush1.bf16.msra.mxu0 0
        %1993 = vmatprep.subr.bf16.mxu0 0
        %1994 = vmatpush1.bf16.msra.mxu0 0
        %1995 = vmatprep.subr.bf16.mxu0 0
        %1996 = vmatpush1.bf16.msra.mxu0 %v1978
        %1997 = vmatprep.subr.bf16.mxu0 0
        %1998 = vmatpush1.bf16.msra.mxu0 %v1977
        %1999 = vmatprep.subr.bf16.mxu0 0
        %2000 = vmatpush1.bf16.msra.mxu0 %v1976
        %2001 = vmatprep.subr.bf16.mxu0 0
        %2002 = vmatpush1.bf16.msra.mxu0 %v1975
        %2003 = vmatprep.subr.bf16.mxu0 0
        %2004 = vmatpush2.bf16.msra.mxu0 0
        %2005 = vmatprep.subr.bf16.mxu0 0
        %2006 = vmatpush2.bf16.msra.mxu0 0
        %2007 = vmatprep.subr.bf16.mxu0 0
        %2008 = vmatpush2.bf16.msra.mxu0 0
        %2009 = vmatprep.subr.bf16.mxu0 0
        %2010 = vmatpush2.bf16.msra.mxu0 0
        %2011 = vmatprep.subr.bf16.mxu0 0
        %2012 = vmatpush2.bf16.msra.mxu0 0
        %2013 = vmatprep.subr.bf16.mxu0 0
        %2014 = vmatpush2.bf16.msra.mxu0 0
        %2015 = vmatprep.subr.bf16.mxu0 0
        %2016 = vmatpush2.bf16.msra.mxu0 0
        %2017 = vmatprep.subr.bf16.mxu0 0
        %2018 = vmatpush2.bf16.msra.mxu0 0
        %2019 = vmatprep.mubr.bf16.mxu0 0
        %2020 = vmatmul.mubr.bf16.gmra.mxu0 %v1985
        %v2021 = vpop.f32.mrf.mxu0
        %v2022 = vadd.f32 %v1957, %v2021
        %v2023 = vpop.f32.mrf.mxu0
        %v2024 = vpop.f32.mrf.mxu0
        %v2025 = vadd.f32 %v1957, %v2024
        %v2026 = vpop.f32.mrf.mxu0
        %2027 = vdwg.mxu0
        %v2028 = vadd.f32 %v2022, %v1855
        %v2029 = vadd.f32 %v2025, %v1856
        %v2030 = vld [vmem:[%s676] sm:$0x1]
        %v2031 = vld [vmem:[%s679] sm:$0x1]
        %v2032 = vsel %vm765, %v2028, 0.0
        %2033 = vadd.xlane.f32.xlu0 %v2032
        %v2034 = vpop.xlane.xlu0 %2033
        %v2035 = vsel %vm765, %v2029, 0.0
        %2036 = vadd.xlane.f32.xlu0 %v2035
        %v2037 = vpop.xlane.xlu0 %2036
        %v2038 = vmul.f32 %v2034, %v1816
        %v2039 = vmul.f32 %v2037, %v1816
        %v2040 = vmul.f32 %v2028, %v2028
        %v2041 = vmul.f32 %v2029, %v2029
        %v2042 = vsel %vm765, %v2040, 0.0
        %2043 = vadd.xlane.f32.xlu0 %v2042
        %v2044 = vpop.xlane.xlu0 %2043
        %v2045 = vsel %vm765, %v2041, 0.0
        %2046 = vadd.xlane.f32.xlu0 %v2045
        %v2047 = vpop.xlane.xlu0 %2046
        %v2048 = vmul.f32 %v2044, %v1816
        %v2049 = vmul.f32 %v2047, %v1816
        %v2050 = vmul.f32 %v2038, %v2038
        %v2051 = vmul.f32 %v2039, %v2039
        %v2052 = vsub.f32 %v2048, %v2050
        %v2053 = vsub.f32 %v2049, %v2051
        %v2054 = vsub.f32 %v2028, %v2038
        %v2055 = vsub.f32 %v2029, %v2039
        %v2056 = vadd.f32 %v2052, 1e-12
        %v2057 = vadd.f32 %v2053, 1e-12
        %v2058 = vrsqrt.pop %v2056
        %v2059 = vrsqrt.pop %v2057
        %v2060 = vmul.f32 %v2054, %v2058
        %v2061 = vmul.f32 %v2055, %v2059
        %v2063 = vlaneseq
        %v2064 = vshrl.u32 %v2063, 7
        %v2065 = vsub.s32 0, %v2064
        %v2066 = vrot.slane %v2030, %v2065
        %v2068 = vmul.f32 %v2060, %v2066
        %v2069 = vmul.f32 %v2061, %v2066
        %v2071 = vlaneseq
        %v2072 = vshrl.u32 %v2071, 7
        %v2073 = vsub.s32 0, %v2072
        %v2074 = vrot.slane %v2031, %v2073
        %v2076 = vadd.f32 %v2068, %v2074
        %v2077 = vadd.f32 %v2069, %v2074
        %2078 = vst.msk [vmem:[#allocation2] sm:$0xff] %vm765, %v2076
        %2079 = vst.msk [vmem:[#allocation2 + $0x8] sm:$0xff] %vm765, %v2077
        %p2080 = scmp.eq.s32.totalorder %s28, 1
        // Predicated region
        $region89: #{sentence_transformer_forward.1} parent=83 // pred_check
          %p2081 = pneg %p2080
        $region90: #{sentence_transformer_forward.1} parent=83 // pred_check_branch
          %2083 = sbr.rel (%p2081) target = $region92
        $region91: #{sentence_transformer_forward.1} parent=83 // pred_region
          %v2084 = vsel %vm765, %v2076, 0.0
          %v2085 = vrot.slane %v2084, 4
          %v2086 = vadd.f32 %v2084, %v2085
          %v2087 = vrot.slane %v2086, 2
          %v2088 = vadd.f32 %v2086, %v2087
          %v2089 = vrot.slane %v2088, 1
          %v2090 = vadd.f32 %v2088, %v2089
          %v2091 = vsel %vm765, %v2077, 0.0
          %v2092 = vrot.slane %v2091, 4
          %v2093 = vadd.f32 %v2091, %v2092
          %v2094 = vrot.slane %v2093, 2
          %v2095 = vadd.f32 %v2093, %v2094
          %v2096 = vrot.slane %v2095, 1
          %v2097 = vadd.f32 %v2095, %v2096
          %v2098 = vrcp.pop 8.0
          %v2099 = vmul.f32 %v2090, %v2098
          %v2100 = vmul.f32 %v2097, %v2098
          %vm2103 = vcmask 1041409
          %v2104 = vsel %vm2103, %v2100, %v2099
          %vm2106 = vcmask 254976
          %2107 = vst.msk [vmem:[#allocation3] sm:$0x3] %vm2106, %v2104
        $region92: #{sentence_transformer_forward.1} parent=83 // pred_fallthru
          _
        // Predicated region
        $region93: #{sentence_transformer_forward.1} parent=83 // pred_check
          %p2108 = pneg %p437
        $region94: #{sentence_transformer_forward.1} parent=83 // pred_check_branch
          %2110 = sbr.rel (%p2108) target = $region96
        $region95: #{sentence_transformer_forward.1} parent=83 // pred_region
          %s2112 = ssub.s32 32, 32
          %2113 = vsyncadd [#allocation4], %s2112
          %s2115 = sshll.u32 [#allocation3], 4
          %s2116 = int_to_ptr.vmem [resolvable:$true] %s2115
          %2118 = dma.vmem_to_hbm [thread:$0]  %s2116, 32, %s16, [#allocation4]
        $region96: #{sentence_transformer_forward.1} parent=83 // pred_fallthru
          _
        // Predicated region
        $region97: #{sentence_transformer_forward.1} parent=83 // pred_check
          %p2119 = pneg %p437
        $region98: #{sentence_transformer_forward.1} parent=83 // pred_check_branch
          %2121 = sbr.rel (%p2119) target = $region100
        $region99: #{sentence_transformer_forward.1} parent=83 // pred_region
          %2122 = dma.done [#allocation4], 32
        $region100: #{sentence_transformer_forward.1} parent=83 // pred_fallthru
          _
      $region84: #{sentence_transformer_forward.1} parent=5 // pred_fallthru
        _
      %p2123 = scmp.le.s32.totalorder 2, %s23
      // Predicated region
      $region101: #{sentence_transformer_forward.1} parent=5 // pred_check
        %p2124 = pneg %p2123
      $region102: #{sentence_transformer_forward.1} parent=5 // pred_check_branch
        %2126 = sbr.rel (%p2124) target = $region104
      $region103: #{sentence_transformer_forward.1} parent=5 // pred_region
        %s2127 = ssub.s32 %s23, 2
      $region104: #{sentence_transformer_forward.1} parent=5 // pred_fallthru
        _
    $region6: #{sentence_transformer_forward.1} parent=1 // loop_footer
      %s27 = sadd.s32 1, %s23
    $region7: #{sentence_transformer_forward.1} parent=1 // loop_footer_branch
      %22 = sbr.rel target = $region3
    $region8: #{sentence_transformer_forward.1} parent=1 // loop_exit
      _
    %2128 = vsyncpa [#allocation4], 1
    %s2129 = scalar_lea.sflag [#allocation4], 1
    %2130 = vsyncpa %s2129, 1

</llo_original>
